<compile_context>
chip_gen: v7x
topology: tpu7x:2x2x1
jax: 0.10.0
libtpu: 0.0.40
codegen_flags: <defaults>
</compile_context>

<pallas_src>
import jax
import jax.numpy as jnp
from jax.experimental import pallas as pl
from jax.experimental.pallas import tpu as pltpu


def _round_up(x, m):
    return ((x + m - 1) // m) * m


def _make_kernel(D, W, tl, Lt, tl_win, cdtype):
    """Kernel closure with static shape parameters."""

    def kernel(h_ref, st_ref, en_ref, wpT_ref, bp_ref, ck_ref, woT_ref, bo_ref,
               o_ref, proj_ref):
        # h_ref:   (1, Lp, D)    zero-padded hidden states for this batch element (resident per b)
        # st_ref:  (1, tl, W)    span start indices for this sequence tile
        # en_ref:  (1, tl, W)    span end indices
        # wpT_ref: (D, 2D)       projection weight^T              (resident)
        # bp_ref:  (1, 2D)       projection bias
        # ck_ref:  (W, D, D)     conv weights, tap-major, each (D_in, D_out)
        # woT_ref: (3D, D)       out_project weight^T, rows ordered [start | end | conv]
        # bo_ref:  (1, D)        out_project bias
        # o_ref:   (1, tl, W*D)  lane-dense output tile
        # proj_ref:(2, Lt, D)    VMEM scratch (input dtype): [0]=start_rep, [1]=end_rep per batch element
        t = pl.program_id(1)

        # (1) Hoisted, once per batch element: full-sequence projection into scratch.
        @pl.when(t == 0)
        def _():
            hL = h_ref[0, :Lt, :]                                   # (Lt, D), input dtype
            proj = jnp.dot(hL, wpT_ref[...],
                           preferred_element_type=jnp.float32)      # f32 accumulation
            proj = proj + bp_ref[...].astype(jnp.float32)
            proj = proj.astype(proj_ref.dtype)
            proj_ref[0] = proj[:, :D]
            proj_ref[1] = proj[:, D:]

        start_rep = proj_ref[0]                                      # (Lt, D)
        end_rep = proj_ref[1]                                        # (Lt, D)

        st = st_ref[0]                                               # (tl, W) int32
        en = en_ref[0]                                               # (tl, W) int32
        pos = jax.lax.broadcasted_iota(jnp.int32, (tl, Lt), 1)       # built once per tile

        # (2) Endpoint gathers batched across widths: rows ordered width-major (w*tl + p).
        oh_s = jnp.concatenate(
            [(st[:, w:w + 1] == pos).astype(cdtype) for w in range(W)], axis=0)   # (W*tl, Lt)
        oh_e = jnp.concatenate(
            [(en[:, w:w + 1] == pos).astype(cdtype) for w in range(W)], axis=0)   # (W*tl, Lt)
        s_all = jnp.dot(oh_s, start_rep, preferred_element_type=jnp.float32)      # (W*tl, D) f32
        e_all = jnp.dot(oh_e, end_rep, preferred_element_type=jnp.float32)        # (W*tl, D) f32

        # (3) ConvShare: one aligned window load per tile, static per-tap sub-slices.
        l0 = pl.multiple_of(t * tl, tl)
        h_win = h_ref[0, pl.ds(l0, tl_win), :]                       # (tl_win, D), aligned start
        cum = jnp.zeros((tl, D), jnp.float32)                        # running tap accumulator
        c_list = []
        for w in range(W):                                           # static unroll over widths
            h_w = h_win[w:w + tl, :]                                 # static sublane shift
            cum = cum + jnp.dot(h_w, ck_ref[w],
                                preferred_element_type=jnp.float32)
            c_list.append(cum)
        c_all = jnp.concatenate(c_list, axis=0)                      # (W*tl, D) f32

        # (4) Fused out_project: ReLU -> (Dropout = identity) -> Linear(3D, D) -> ReLU,
        #     one merged K=3D matmul over all W widths at once.
        cat = jnp.concatenate([s_all, e_all, c_all], axis=1)         # (W*tl, 3D)
        cat = jnp.maximum(cat, 0.0).astype(cdtype)
        z = jnp.dot(cat, woT_ref[...], preferred_element_type=jnp.float32)
        z = jnp.maximum(z + bo_ref[...].astype(jnp.float32), 0.0).astype(cdtype)  # (W*tl, D)

        # (5) Store: per-width lane-aligned stores when D is a lane multiple,
        #     otherwise a single lane-dense concatenated store.
        if D % 128 == 0:
            for w in range(W):
                o_ref[0, :, w * D:(w + 1) * D] = z[w * tl:(w + 1) * tl, :]
        else:
            o_ref[0] = jnp.concatenate(
                [z[w * tl:(w + 1) * tl, :] for w in range(W)], axis=1)

    return kernel


def spanmarkconv_forward(h, span_idx, proj_w, proj_b, conv_w, out_w, out_b, *, tl=None):
    """SpanMarkConv forward (inference).

    h:        (B, L, D) float
    span_idx: (B, L*W, 2) int   -- (start, end) token indices per span, spans flattened as l*W + w
    proj_w:   (2D, D), proj_b: (2D,)      -- self.project
    conv_w:   (D, D, W)                   -- ConvShare.conv_weigth
    out_w:    (D, 3D), out_b: (D,)        -- out_project Linear
    returns   (B, L, W, D)
    """
    B, L, D = h.shape
    Do, Di, W = conv_w.shape
    assert Do == D and Di == D
    assert span_idx.shape == (B, L * W, 2)

    cdtype = h.dtype
    itm = jnp.dtype(cdtype).itemsize
    halo = _round_up(W - 1, 8) if W > 1 else 0

    def shapes_for(tl_):
        Lt_ = _round_up(L, tl_)
        Lp_ = Lt_ + halo
        return Lt_, Lp_

    def vmem_estimate(tl_):
        """Rough resident + transient VMEM bytes for a given sequence tile."""
        Lt_, Lp_ = shapes_for(tl_)
        weights = (D * 2 * D + 2 * D + W * D * D + 3 * D * D + D) * itm
        h_blk = Lp_ * D * itm
        span_blk = 2 * tl_ * W * 4
        out_blk = tl_ * W * D * itm
        scratch = 2 * Lt_ * D * itm
        transient = (2 * W * tl_ * Lt_ + 4 * W * tl_ * D + W * tl_ * 3 * D) * 4
        return 2 * (weights + h_blk + span_blk + out_blk) + scratch + transient

    # Per-core VMEM capacity (v5e/v6e: 128 MiB, v7x: 64 MiB); conservative fallback.
    vmem_cap = 64 * 1024 * 1024
    try:
        vmem_cap = int(pltpu.get_tpu_info().vmem_capacity_bytes)
    except Exception:
        pass
    budget = int(0.70 * vmem_cap)

    # Sequence-axis row tile: large (up to 512), multiple of 8, shrunk to fit VMEM.
    if tl is None:
        tl = min(_round_up(L, 8), 512)
    tl = max(8, (tl // 8) * 8)
    while tl > 8 and vmem_estimate(tl) > budget:
        tl = max(8, ((tl // 2) // 8) * 8)

    Lt, Lp = shapes_for(tl)
    T = Lt // tl
    tl_win = tl + halo

    # Zero-padded inputs (handles arbitrary L; padded rows trimmed at the end).
    h_pad = jnp.zeros((B, Lp, D), cdtype).at[:, :L, :].set(h)
    si = span_idx.reshape(B, L, W, 2).astype(jnp.int32)
    starts = jnp.zeros((B, Lt, W), jnp.int32).at[:, :L, :].set(si[..., 0])
    ends = jnp.zeros((B, Lt, W), jnp.int32).at[:, :L, :].set(si[..., 1])

    # Pre-transposed weights in the compute dtype (grid-invariant, resident in VMEM).
    wpT = proj_w.T.astype(cdtype)                               # (D, 2D)
    bp = proj_b.reshape(1, 2 * D).astype(cdtype)
    ckT = jnp.transpose(conv_w, (2, 1, 0)).astype(cdtype)       # (W, D_in, D_out)
    woT = out_w.T.astype(cdtype)                                # (3D, D), rows [start|end|conv]
    bo = out_b.reshape(1, D).astype(cdtype)

    kernel = _make_kernel(D, W, tl, Lt, tl_win, cdtype)

    vmem_limit = int(min(max(vmem_estimate(tl) + (16 << 20), 32 << 20),
                         int(0.85 * vmem_cap)))

    out_flat = pl.pallas_call(
        kernel,
        out_shape=jax.ShapeDtypeStruct((B, Lt, W * D), cdtype),
        grid_spec=pltpu.PrefetchScalarGridSpec(
            num_scalar_prefetch=0,
            grid=(B, T),
            in_specs=[
                pl.BlockSpec((1, Lp, D), lambda b, t: (b, 0, 0)),      # h_pad (resident per b)
                pl.BlockSpec((1, tl, W), lambda b, t: (b, t, 0)),      # span starts
                pl.BlockSpec((1, tl, W), lambda b, t: (b, t, 0)),      # span ends
                pl.BlockSpec((D, 2 * D), lambda b, t: (0, 0)),         # WpT
                pl.BlockSpec((1, 2 * D), lambda b, t: (0, 0)),         # bp
                pl.BlockSpec((W, D, D), lambda b, t: (0, 0, 0)),       # conv taps
                pl.BlockSpec((3 * D, D), lambda b, t: (0, 0)),         # merged out_project weight^T
                pl.BlockSpec((1, D), lambda b, t: (0, 0)),             # b_out
            ],
            out_specs=pl.BlockSpec((1, tl, W * D), lambda b, t: (b, t, 0)),
            scratch_shapes=[pltpu.VMEM((2, Lt, D), cdtype)],           # per-batch projection
        ),
        compiler_params=pltpu.CompilerParams(
            dimension_semantics=("parallel", "arbitrary"),
            vmem_limit_bytes=vmem_limit,
        ),
    )(h_pad, starts, ends, wpT, bp, ckT, woT, bo)

    return out_flat.reshape(B, Lt, W, D)[:, :L]


def spanmarkconv_reference(h, span_idx, proj_w, proj_b, conv_w, out_w, out_b):
    """Pure-JAX reference mirroring the PyTorch forward (eval mode, dropout=identity)."""
    B, L, D = h.shape
    W = conv_w.shape[2]
    proj = h @ proj_w.T + proj_b                         # (B, L, 2D)
    start_rep, end_rep = proj[..., :D], proj[..., D:]
    st = span_idx[..., 0].astype(jnp.int32)              # (B, L*W)
    en = span_idx[..., 1].astype(jnp.int32)
    s_rep = jnp.take_along_axis(start_rep, st[:, :, None], axis=1)   # (B, L*W, D)
    e_rep = jnp.take_along_axis(end_rep, en[:, :, None], axis=1)
    # ConvShare: c[b,l,w,:] = sum_{k<=w} conv_w[:,:,k] @ h_pad[b,l+k,:]
    h_zp = jnp.pad(h, ((0, 0), (0, W - 1), (0, 0)))
    cum = jnp.zeros((B, L, D), jnp.float32)
    taps = []
    for k in range(W):
        cum = cum + jnp.einsum('bld,od->blo', h_zp[:, k:k + L, :], conv_w[:, :, k])
        taps.append(cum)
    c = jnp.stack(taps, axis=2).reshape(B, L * W, D)
    cat = jnp.concatenate([s_rep, e_rep, c], axis=-1)                 # (B, L*W, 3D)
    z = jnp.maximum(cat, 0.0) @ out_w.T + out_b
    return jnp.maximum(z, 0.0).reshape(B, L, W, D)


if __name__ == "__main__":
    # Small shapes consistent with the module: batch=2, seq=8, hidden=32, max_width=4.
    B, L, D, W = 2, 8, 32, 4

    key = jax.random.PRNGKey(0)
    k_h, k_pw, k_pb, k_cw, k_ow, k_ob = jax.random.split(key, 6)

    h = jax.random.normal(k_h, (B, L, D), dtype=jnp.float32)
    proj_w = jax.random.normal(k_pw, (2 * D, D), dtype=jnp.float32) * 0.1
    proj_b = jax.random.normal(k_pb, (2 * D,), dtype=jnp.float32) * 0.1
    conv_w = jax.random.normal(k_cw, (D, D, W), dtype=jnp.float32) * 0.1
    out_w = jax.random.normal(k_ow, (D, 3 * D), dtype=jnp.float32) * 0.05
    out_b = jax.random.normal(k_ob, (D,), dtype=jnp.float32) * 0.05

    # span_idx[b, l*W + w] = (l, min(l + w, L - 1)) -- standard enumeration of spans.
    ls = jnp.arange(L)[:, None]
    ws = jnp.arange(W)[None, :]
    starts = jnp.broadcast_to(ls, (L, W))
    ends = jnp.minimum(ls + ws, L - 1)
    span_idx = jnp.stack([starts, ends], axis=-1).reshape(L * W, 2)
    span_idx = jnp.broadcast_to(span_idx[None], (B, L * W, 2)).astype(jnp.int32)

    out = spanmarkconv_forward(h, span_idx, proj_w, proj_b, conv_w, out_w, out_b)
    out = jax.block_until_ready(out)

    ref = spanmarkconv_reference(h, span_idx, proj_w, proj_b, conv_w, out_w, out_b)
    assert out.shape == (B, L, W, D)
    assert jnp.allclose(out, ref, atol=1e-3, rtol=1e-3), "mismatch vs reference"

    print("KERNEL_OK")
</pallas_src>

<mosaic_0001>
module attributes {stable_mosaic.version = 11 : i64} {
  func.func @kernel(%arg0: i32, %arg1: i32, %arg2: memref<1x16x32xf32, #tpu.memory_space<vmem>>, %arg3: memref<1x8x4xi32, #tpu.memory_space<vmem>>, %arg4: memref<1x8x4xi32, #tpu.memory_space<vmem>>, %arg5: memref<32x64xf32, #tpu.memory_space<vmem>>, %arg6: memref<1x64xf32, #tpu.memory_space<vmem>>, %arg7: memref<4x32x32xf32, #tpu.memory_space<vmem>>, %arg8: memref<96x32xf32, #tpu.memory_space<vmem>>, %arg9: memref<1x32xf32, #tpu.memory_space<vmem>>, %arg10: memref<1x8x128xf32, #tpu.memory_space<vmem>>, %arg11: memref<2x8x32xf32, #tpu.memory_space<vmem>>) attributes {dimension_semantics = [#tpu.dimension_semantics<parallel>, #tpu.dimension_semantics<arbitrary>], iteration_bounds = array<i64: 2, 1>, scalar_prefetch = 0 : i64, scratch_operands = 1 : i64, tpu.core_type = #tpu.core_type<tc>, window_params = [{transform_indices = @transform_0, window_bounds = array<i64: 1, 16, 32>}, {transform_indices = @transform_1, window_bounds = array<i64: 1, 8, 4>}, {transform_indices = @transform_2, window_bounds = array<i64: 1, 8, 4>}, {pipeline_mode = #tpu.pipeline_mode<synchronous>, transform_indices = @transform_3, window_bounds = array<i64: 32, 64>}, {pipeline_mode = #tpu.pipeline_mode<synchronous>, transform_indices = @transform_4, window_bounds = array<i64: 1, 64>}, {pipeline_mode = #tpu.pipeline_mode<synchronous>, transform_indices = @transform_5, window_bounds = array<i64: 4, 32, 32>}, {pipeline_mode = #tpu.pipeline_mode<synchronous>, transform_indices = @transform_6, window_bounds = array<i64: 96, 32>}, {pipeline_mode = #tpu.pipeline_mode<synchronous>, transform_indices = @transform_7, window_bounds = array<i64: 1, 32>}, {transform_indices = @transform_8, window_bounds = array<i64: 1, 8, 128>}]} {
    %c0_i32 = arith.constant 0 : i32
    %0 = arith.cmpi eq, %arg1, %c0_i32 : i32
    %1 = arith.extui %0 : i1 to i32
    %c0_i32_0 = arith.constant 0 : i32
    %2 = arith.cmpi ne, %1, %c0_i32_0 : i32
    scf.if %2 {
      %c0_39 = arith.constant 0 : index
      %c0_40 = arith.constant 0 : index
      %c0_41 = arith.constant 0 : index
      %101 = vector.load %arg2[%c0_39, %c0_40, %c0_41] : memref<1x16x32xf32, #tpu.memory_space<vmem>>, vector<1x8x32xf32>
      %102 = vector.shape_cast %101 : vector<1x8x32xf32> to vector<8x32xf32>
      %c0_42 = arith.constant 0 : index
      %c0_43 = arith.constant 0 : index
      %103 = vector.load %arg5[%c0_42, %c0_43] : memref<32x64xf32, #tpu.memory_space<vmem>>, vector<32x64xf32>
      %cst_44 = arith.constant dense<0.000000e+00> : vector<8x64xf32>
      %104 = tpu.matmul %102, %103, %cst_44 {dimension_numbers = #tpu.dot_dimension_numbers<[1], [0], [0], [1], [0, 0, 1, 1], [], []>} : vector<8x32xf32>, vector<32x64xf32>, vector<8x64xf32> -> vector<8x64xf32>
      %c0_45 = arith.constant 0 : index
      %c0_46 = arith.constant 0 : index
      %105 = vector.load %arg6[%c0_45, %c0_46] : memref<1x64xf32, #tpu.memory_space<vmem>>, vector<1x64xf32>
      %106 = vector.broadcast %105 : vector<1x64xf32> to vector<8x64xf32>
      %107 = arith.addf %104, %106 : vector<8x64xf32>
      %108 = vector.extract_strided_slice %107 {offsets = [0, 0], sizes = [8, 32], strides = [1, 1]} : vector<8x64xf32> to vector<8x32xf32>
      %c0_47 = arith.constant 0 : index
      %c0_48 = arith.constant 0 : index
      %c0_49 = arith.constant 0 : index
      %109 = vector.load %arg11[%c0_47, %c0_48, %c0_49] : memref<2x8x32xf32, #tpu.memory_space<vmem>>, vector<1x8x32xf32>
      %110 = vector.shape_cast %109 : vector<1x8x32xf32> to vector<8x32xf32>
      %111 = vector.shape_cast %108 : vector<8x32xf32> to vector<1x8x32xf32>
      tpu.vector_store %arg11[%c0_47, %c0_48, %c0_49], %111 {strides = array<i32>} : memref<2x8x32xf32, #tpu.memory_space<vmem>>, vector<1x8x32xf32>,
      %112 = vector.extract_strided_slice %107 {offsets = [0, 32], sizes = [8, 32], strides = [1, 1]} : vector<8x64xf32> to vector<8x32xf32>
      %c1_50 = arith.constant 1 : index
      %c0_51 = arith.constant 0 : index
      %c0_52 = arith.constant 0 : index
      %113 = vector.load %arg11[%c1_50, %c0_51, %c0_52] : memref<2x8x32xf32, #tpu.memory_space<vmem>>, vector<1x8x32xf32>
      %114 = vector.shape_cast %113 : vector<1x8x32xf32> to vector<8x32xf32>
      %115 = vector.shape_cast %112 : vector<8x32xf32> to vector<1x8x32xf32>
      tpu.vector_store %arg11[%c1_50, %c0_51, %c0_52], %115 {strides = array<i32>} : memref<2x8x32xf32, #tpu.memory_space<vmem>>, vector<1x8x32xf32>,
    } else {
    }
    %c0 = arith.constant 0 : index
    %c0_1 = arith.constant 0 : index
    %c0_2 = arith.constant 0 : index
    %3 = vector.load %arg11[%c0, %c0_1, %c0_2] : memref<2x8x32xf32, #tpu.memory_space<vmem>>, vector<1x8x32xf32>
    %4 = vector.shape_cast %3 : vector<1x8x32xf32> to vector<8x32xf32>
    %c1 = arith.constant 1 : index
    %c0_3 = arith.constant 0 : index
    %c0_4 = arith.constant 0 : index
    %5 = vector.load %arg11[%c1, %c0_3, %c0_4] : memref<2x8x32xf32, #tpu.memory_space<vmem>>, vector<1x8x32xf32>
    %6 = vector.shape_cast %5 : vector<1x8x32xf32> to vector<8x32xf32>
    %c0_5 = arith.constant 0 : index
    %c0_6 = arith.constant 0 : index
    %c0_7 = arith.constant 0 : index
    %7 = vector.load %arg3[%c0_5, %c0_6, %c0_7] : memref<1x8x4xi32, #tpu.memory_space<vmem>>, vector<1x8x4xi32>
    %8 = vector.shape_cast %7 : vector<1x8x4xi32> to vector<8x4xi32>
    %c0_8 = arith.constant 0 : index
    %c0_9 = arith.constant 0 : index
    %c0_10 = arith.constant 0 : index
    %9 = vector.load %arg4[%c0_8, %c0_9, %c0_10] : memref<1x8x4xi32, #tpu.memory_space<vmem>>, vector<1x8x4xi32>
    %10 = vector.shape_cast %9 : vector<1x8x4xi32> to vector<8x4xi32>
    %11 = tpu.iota {dimensions = array<i32: 1>} : vector<8x8xi32>
    %12 = vector.extract_strided_slice %8 {offsets = [0, 0], sizes = [8, 1], strides = [1, 1]} : vector<8x4xi32> to vector<8x1xi32>
    %13 = vector.broadcast %12 : vector<8x1xi32> to vector<8x8xi32>
    %14 = arith.cmpi eq, %13, %11 : vector<8x8xi32>
    %15 = arith.extui %14 : vector<8x8xi1> to vector<8x8xi32>
    %16 = arith.sitofp %15 : vector<8x8xi32> to vector<8x8xf32>
    %17 = vector.extract_strided_slice %8 {offsets = [0, 1], sizes = [8, 1], strides = [1, 1]} : vector<8x4xi32> to vector<8x1xi32>
    %18 = vector.broadcast %17 : vector<8x1xi32> to vector<8x8xi32>
    %19 = arith.cmpi eq, %18, %11 : vector<8x8xi32>
    %20 = arith.extui %19 : vector<8x8xi1> to vector<8x8xi32>
    %21 = arith.sitofp %20 : vector<8x8xi32> to vector<8x8xf32>
    %22 = vector.extract_strided_slice %8 {offsets = [0, 2], sizes = [8, 1], strides = [1, 1]} : vector<8x4xi32> to vector<8x1xi32>
    %23 = vector.broadcast %22 : vector<8x1xi32> to vector<8x8xi32>
    %24 = arith.cmpi eq, %23, %11 : vector<8x8xi32>
    %25 = arith.extui %24 : vector<8x8xi1> to vector<8x8xi32>
    %26 = arith.sitofp %25 : vector<8x8xi32> to vector<8x8xf32>
    %27 = vector.extract_strided_slice %8 {offsets = [0, 3], sizes = [8, 1], strides = [1, 1]} : vector<8x4xi32> to vector<8x1xi32>
    %28 = vector.broadcast %27 : vector<8x1xi32> to vector<8x8xi32>
    %29 = arith.cmpi eq, %28, %11 : vector<8x8xi32>
    %30 = arith.extui %29 : vector<8x8xi1> to vector<8x8xi32>
    %31 = arith.sitofp %30 : vector<8x8xi32> to vector<8x8xf32>
    %32 = tpu.concatenate %16, %21, %26, %31 in 0 : vector<8x8xf32>, vector<8x8xf32>, vector<8x8xf32>, vector<8x8xf32> -> vector<32x8xf32>
    %33 = vector.extract_strided_slice %10 {offsets = [0, 0], sizes = [8, 1], strides = [1, 1]} : vector<8x4xi32> to vector<8x1xi32>
    %34 = vector.broadcast %33 : vector<8x1xi32> to vector<8x8xi32>
    %35 = arith.cmpi eq, %34, %11 : vector<8x8xi32>
    %36 = arith.extui %35 : vector<8x8xi1> to vector<8x8xi32>
    %37 = arith.sitofp %36 : vector<8x8xi32> to vector<8x8xf32>
    %38 = vector.extract_strided_slice %10 {offsets = [0, 1], sizes = [8, 1], strides = [1, 1]} : vector<8x4xi32> to vector<8x1xi32>
    %39 = vector.broadcast %38 : vector<8x1xi32> to vector<8x8xi32>
    %40 = arith.cmpi eq, %39, %11 : vector<8x8xi32>
    %41 = arith.extui %40 : vector<8x8xi1> to vector<8x8xi32>
    %42 = arith.sitofp %41 : vector<8x8xi32> to vector<8x8xf32>
    %43 = vector.extract_strided_slice %10 {offsets = [0, 2], sizes = [8, 1], strides = [1, 1]} : vector<8x4xi32> to vector<8x1xi32>
    %44 = vector.broadcast %43 : vector<8x1xi32> to vector<8x8xi32>
    %45 = arith.cmpi eq, %44, %11 : vector<8x8xi32>
    %46 = arith.extui %45 : vector<8x8xi1> to vector<8x8xi32>
    %47 = arith.sitofp %46 : vector<8x8xi32> to vector<8x8xf32>
    %48 = vector.extract_strided_slice %10 {offsets = [0, 3], sizes = [8, 1], strides = [1, 1]} : vector<8x4xi32> to vector<8x1xi32>
    %49 = vector.broadcast %48 : vector<8x1xi32> to vector<8x8xi32>
    %50 = arith.cmpi eq, %49, %11 : vector<8x8xi32>
    %51 = arith.extui %50 : vector<8x8xi1> to vector<8x8xi32>
    %52 = arith.sitofp %51 : vector<8x8xi32> to vector<8x8xf32>
    %53 = tpu.concatenate %37, %42, %47, %52 in 0 : vector<8x8xf32>, vector<8x8xf32>, vector<8x8xf32>, vector<8x8xf32> -> vector<32x8xf32>
    %cst = arith.constant dense<0.000000e+00> : vector<32x32xf32>
    %54 = tpu.matmul %32, %4, %cst {dimension_numbers = #tpu.dot_dimension_numbers<[1], [0], [0], [1], [0, 0, 1, 1], [], []>} : vector<32x8xf32>, vector<8x32xf32>, vector<32x32xf32> -> vector<32x32xf32>
    %cst_11 = arith.constant dense<0.000000e+00> : vector<32x32xf32>
    %55 = tpu.matmul %53, %6, %cst_11 {dimension_numbers = #tpu.dot_dimension_numbers<[1], [0], [0], [1], [0, 0, 1, 1], [], []>} : vector<32x8xf32>, vector<8x32xf32>, vector<32x32xf32> -> vector<32x32xf32>
    %c8_i32 = arith.constant 8 : i32
    %56 = arith.muli %arg1, %c8_i32 : i32
    %57 = tpu.assume_multiple %56, 8 : i32
    %c0_12 = arith.constant 0 : index
    %58 = arith.index_cast %57 : i32 to index
    %c0_13 = arith.constant 0 : index
    %59 = vector.load %arg2[%c0_12, %58, %c0_13] : memref<1x16x32xf32, #tpu.memory_space<vmem>>, vector<1x16x32xf32>
    %60 = vector.shape_cast %59 : vector<1x16x32xf32> to vector<16x32xf32>
    %cst_14 = arith.constant 0.000000e+00 : f32
    %61 = vector.broadcast %cst_14 : f32 to vector<8x32xf32>
    %62 = vector.extract_strided_slice %60 {offsets = [0, 0], sizes = [8, 32], strides = [1, 1]} : vector<16x32xf32> to vector<8x32xf32>
    %c0_15 = arith.constant 0 : index
    %c0_16 = arith.constant 0 : index
    %c0_17 = arith.constant 0 : index
    %63 = vector.load %arg7[%c0_15, %c0_16, %c0_17] : memref<4x32x32xf32, #tpu.memory_space<vmem>>, vector<1x32x32xf32>
    %64 = vector.shape_cast %63 : vector<1x32x32xf32> to vector<32x32xf32>
    %cst_18 = arith.constant dense<0.000000e+00> : vector<8x32xf32>
    %65 = tpu.matmul %62, %64, %cst_18 {dimension_numbers = #tpu.dot_dimension_numbers<[1], [0], [0], [1], [0, 0, 1, 1], [], []>} : vector<8x32xf32>, vector<32x32xf32>, vector<8x32xf32> -> vector<8x32xf32>
    %66 = arith.addf %61, %65 : vector<8x32xf32>
    %67 = vector.extract_strided_slice %60 {offsets = [1, 0], sizes = [8, 32], strides = [1, 1]} : vector<16x32xf32> to vector<8x32xf32>
    %c1_19 = arith.constant 1 : index
    %c0_20 = arith.constant 0 : index
    %c0_21 = arith.constant 0 : index
    %68 = vector.load %arg7[%c1_19, %c0_20, %c0_21] : memref<4x32x32xf32, #tpu.memory_space<vmem>>, vector<1x32x32xf32>
    %69 = vector.shape_cast %68 : vector<1x32x32xf32> to vector<32x32xf32>
    %cst_22 = arith.constant dense<0.000000e+00> : vector<8x32xf32>
    %70 = tpu.matmul %67, %69, %cst_22 {dimension_numbers = #tpu.dot_dimension_numbers<[1], [0], [0], [1], [0, 0, 1, 1], [], []>} : vector<8x32xf32>, vector<32x32xf32>, vector<8x32xf32> -> vector<8x32xf32>
    %71 = arith.addf %66, %70 : vector<8x32xf32>
    %72 = vector.extract_strided_slice %60 {offsets = [2, 0], sizes = [8, 32], strides = [1, 1]} : vector<16x32xf32> to vector<8x32xf32>
    %c2 = arith.constant 2 : index
    %c0_23 = arith.constant 0 : index
    %c0_24 = arith.constant 0 : index
    %73 = vector.load %arg7[%c2, %c0_23, %c0_24] : memref<4x32x32xf32, #tpu.memory_space<vmem>>, vector<1x32x32xf32>
    %74 = vector.shape_cast %73 : vector<1x32x32xf32> to vector<32x32xf32>
    %cst_25 = arith.constant dense<0.000000e+00> : vector<8x32xf32>
    %75 = tpu.matmul %72, %74, %cst_25 {dimension_numbers = #tpu.dot_dimension_numbers<[1], [0], [0], [1], [0, 0, 1, 1], [], []>} : vector<8x32xf32>, vector<32x32xf32>, vector<8x32xf32> -> vector<8x32xf32>
    %76 = arith.addf %71, %75 : vector<8x32xf32>
    %77 = vector.extract_strided_slice %60 {offsets = [3, 0], sizes = [8, 32], strides = [1, 1]} : vector<16x32xf32> to vector<8x32xf32>
    %c3 = arith.constant 3 : index
    %c0_26 = arith.constant 0 : index
    %c0_27 = arith.constant 0 : index
    %78 = vector.load %arg7[%c3, %c0_26, %c0_27] : memref<4x32x32xf32, #tpu.memory_space<vmem>>, vector<1x32x32xf32>
    %79 = vector.shape_cast %78 : vector<1x32x32xf32> to vector<32x32xf32>
    %cst_28 = arith.constant dense<0.000000e+00> : vector<8x32xf32>
    %80 = tpu.matmul %77, %79, %cst_28 {dimension_numbers = #tpu.dot_dimension_numbers<[1], [0], [0], [1], [0, 0, 1, 1], [], []>} : vector<8x32xf32>, vector<32x32xf32>, vector<8x32xf32> -> vector<8x32xf32>
    %81 = arith.addf %76, %80 : vector<8x32xf32>
    %82 = tpu.concatenate %66, %71, %76, %81 in 0 : vector<8x32xf32>, vector<8x32xf32>, vector<8x32xf32>, vector<8x32xf32> -> vector<32x32xf32>
    %83 = tpu.concatenate %54, %55, %82 in 1 : vector<32x32xf32>, vector<32x32xf32>, vector<32x32xf32> -> vector<32x96xf32>
    %cst_29 = arith.constant 0.000000e+00 : f32
    %84 = vector.broadcast %cst_29 : f32 to vector<32x96xf32>
    %85 = arith.maximumf %83, %84 : vector<32x96xf32>
    %c0_30 = arith.constant 0 : index
    %c0_31 = arith.constant 0 : index
    %86 = vector.load %arg8[%c0_30, %c0_31] : memref<96x32xf32, #tpu.memory_space<vmem>>, vector<96x32xf32>
    %cst_32 = arith.constant dense<0.000000e+00> : vector<32x32xf32>
    %87 = tpu.matmul %85, %86, %cst_32 {dimension_numbers = #tpu.dot_dimension_numbers<[1], [0], [0], [1], [0, 0, 1, 1], [], []>} : vector<32x96xf32>, vector<96x32xf32>, vector<32x32xf32> -> vector<32x32xf32>
    %c0_33 = arith.constant 0 : index
    %c0_34 = arith.constant 0 : index
    %88 = vector.load %arg9[%c0_33, %c0_34] : memref<1x32xf32, #tpu.memory_space<vmem>>, vector<1x32xf32>
    %89 = vector.broadcast %88 : vector<1x32xf32> to vector<32x32xf32>
    %90 = arith.addf %87, %89 : vector<32x32xf32>
    %cst_35 = arith.constant 0.000000e+00 : f32
    %91 = vector.broadcast %cst_35 : f32 to vector<32x32xf32>
    %92 = arith.maximumf %90, %91 : vector<32x32xf32>
    %93 = vector.extract_strided_slice %92 {offsets = [0, 0], sizes = [8, 32], strides = [1, 1]} : vector<32x32xf32> to vector<8x32xf32>
    %94 = vector.extract_strided_slice %92 {offsets = [8, 0], sizes = [8, 32], strides = [1, 1]} : vector<32x32xf32> to vector<8x32xf32>
    %95 = vector.extract_strided_slice %92 {offsets = [16, 0], sizes = [8, 32], strides = [1, 1]} : vector<32x32xf32> to vector<8x32xf32>
    %96 = vector.extract_strided_slice %92 {offsets = [24, 0], sizes = [8, 32], strides = [1, 1]} : vector<32x32xf32> to vector<8x32xf32>
    %97 = tpu.concatenate %93, %94, %95, %96 in 1 : vector<8x32xf32>, vector<8x32xf32>, vector<8x32xf32>, vector<8x32xf32> -> vector<8x128xf32>
    %c0_36 = arith.constant 0 : index
    %c0_37 = arith.constant 0 : index
    %c0_38 = arith.constant 0 : index
    %98 = vector.load %arg10[%c0_36, %c0_37, %c0_38] : memref<1x8x128xf32, #tpu.memory_space<vmem>>, vector<1x8x128xf32>
    %99 = vector.shape_cast %98 : vector<1x8x128xf32> to vector<8x128xf32>
    %100 = vector.shape_cast %97 : vector<8x128xf32> to vector<1x8x128xf32>
    tpu.vector_store %arg10[%c0_36, %c0_37, %c0_38], %100 {strides = array<i32>} : memref<1x8x128xf32, #tpu.memory_space<vmem>>, vector<1x8x128xf32>,
    return
  }
  func.func @transform_0(%arg0: i32, %arg1: i32) -> (i32, i32, i32) {
    %c0_i32 = arith.constant 0 : i32
    %c0_i32_0 = arith.constant 0 : i32
    %c0_i32_1 = arith.constant 0 : i32
    return %arg0, %c0_i32, %c0_i32_0 : i32, i32, i32
  }
  func.func @transform_1(%arg0: i32, %arg1: i32) -> (i32, i32, i32) {
    %c0_i32 = arith.constant 0 : i32
    %c0_i32_0 = arith.constant 0 : i32
    return %arg0, %arg1, %c0_i32 : i32, i32, i32
  }
  func.func @transform_2(%arg0: i32, %arg1: i32) -> (i32, i32, i32) {
    %c0_i32 = arith.constant 0 : i32
    %c0_i32_0 = arith.constant 0 : i32
    return %arg0, %arg1, %c0_i32 : i32, i32, i32
  }
  func.func @transform_3(%arg0: i32, %arg1: i32) -> (i32, i32) {
    %c0_i32 = arith.constant 0 : i32
    %c0_i32_0 = arith.constant 0 : i32
    %c0_i32_1 = arith.constant 0 : i32
    return %c0_i32, %c0_i32_0 : i32, i32
  }
  func.func @transform_4(%arg0: i32, %arg1: i32) -> (i32, i32) {
    %c0_i32 = arith.constant 0 : i32
    %c0_i32_0 = arith.constant 0 : i32
    %c0_i32_1 = arith.constant 0 : i32
    return %c0_i32, %c0_i32_0 : i32, i32
  }
  func.func @transform_5(%arg0: i32, %arg1: i32) -> (i32, i32, i32) {
    %c0_i32 = arith.constant 0 : i32
    %c0_i32_0 = arith.constant 0 : i32
    %c0_i32_1 = arith.constant 0 : i32
    %c0_i32_2 = arith.constant 0 : i32
    return %c0_i32, %c0_i32_0, %c0_i32_1 : i32, i32, i32
  }
  func.func @transform_6(%arg0: i32, %arg1: i32) -> (i32, i32) {
    %c0_i32 = arith.constant 0 : i32
    %c0_i32_0 = arith.constant 0 : i32
    %c0_i32_1 = arith.constant 0 : i32
    return %c0_i32, %c0_i32_0 : i32, i32
  }
  func.func @transform_7(%arg0: i32, %arg1: i32) -> (i32, i32) {
    %c0_i32 = arith.constant 0 : i32
    %c0_i32_0 = arith.constant 0 : i32
    %c0_i32_1 = arith.constant 0 : i32
    return %c0_i32, %c0_i32_0 : i32, i32
  }
  func.func @transform_8(%arg0: i32, %arg1: i32) -> (i32, i32, i32) {
    %c0_i32 = arith.constant 0 : i32
    %c0_i32_0 = arith.constant 0 : i32
    return %arg0, %arg1, %c0_i32 : i32, i32, i32
  }
}

</mosaic_0001>

<llo_original>
// kernel: tpu_custom_call.1
$region0: #{tpu_custom_call.1}
  #allocation0 [shape = 'u32[]', space=smem, size = 0x4, offset = 0x4, fixed_abs, tag = 'smem constant byte address 0x4 - core index']
  #allocation1 [shape = 'u32[144,128]{1,0:T(1,128)}', space=vmem, size = 0x12000, scoped, tag = 'internal scratch']
  #allocation2 [shape = 'f32[2,8,32]{2,1,0:T(8,128)}', space=vmem, size = 0x2000, scoped, tag = 'scratch operand']
  %s0 = inlined_call_operand.vmem [shape: f32[2,16,32], index: 0, kind: input, shape index: {}]
  %s1 = inlined_call_operand.vmem [shape: s32[2,8,4], index: 1, kind: input, shape index: {}]
  %s2 = inlined_call_operand.vmem [shape: s32[2,8,4], index: 2, kind: input, shape index: {}]
  %s3 = inlined_call_operand.hbm [shape: f32[32,64], index: 3, kind: input, shape index: {}]
  %s4 = inlined_call_operand.vmem [shape: f32[1,64], index: 4, kind: input, shape index: {}]
  %s5 = inlined_call_operand.vmem [shape: f32[4,32,32], index: 5, kind: input, shape index: {}]
  %s6 = inlined_call_operand.vmem [shape: f32[96,32], index: 6, kind: input, shape index: {}]
  %s7 = inlined_call_operand.vmem [shape: f32[1,32], index: 7, kind: input, shape index: {}]
  %s8 = inlined_call_operand.hbm [shape: f32[2,8,128], index: 8, kind: output, shape index: {}]
  %s9 = sld [smem:[#allocation0]]
  $region73: #{tpu_custom_call.1} parent=0
    _
  %s11 = ssub.s32 1, %s9
  %s12 = scalar_select 0, %s11, %s9
  $region1: #{tpu_custom_call.1} parent=0
    #allocation3 [shape = 'u8[16384]{0}', space=vmem, size = 0x4000, scoped, tag = 'input window, operand 3, single buffered']
    #allocation4 [shape = 's32[2]{0}', space=sflag, size = 0x8, scoped, tag = 'scoped memory for tpu_custom_call.1']
    #allocation5 [shape = 's32[2]{0}', space=sflag, size = 0x8, scoped, tag = 'scoped memory for tpu_custom_call.1']
    #allocation6 [shape = 'u8[8192]{0}', space=vmem, size = 0x2000, scoped, tag = 'output window, operand 0']
    %13 = vsyncpa [#allocation4], 0
    %14 = vsyncpa [#allocation5], 0
    %s15 = scalar_lea.sflag [#allocation5], 1
    %16 = vsyncpa %s15, 0
    loop: start=0, step=1, limit=4
    $region2: #{tpu_custom_call.1} parent=1 // loop_pre_header
      _
    $region3: #{tpu_custom_call.1} parent=1 // loop_header
      %s18 = sphi 0, %s22
      %p19 = scmp.ge.s32.totalorder %s18, 4
      %s25 = sphi 0, %s37
      %s26 = sphi 0, %s33
      %s27 = sphi 0, %s25
      %s28 = sphi 0, %s26
      %s29 = sphi 0, %s27
      %s30 = sphi 0, %s28
      %s40 = sphi 0, %s42
      %s43 = sphi 0, %s40
      %s44 = sphi 0, %s43
      %s60 = sphi 0, %s44
      %s68 = sphi 0, %s70
      %s71 = sphi 0, %s68
      %s72 = sphi 0, %s71
      %s88 = sphi 0, %s72
      %s96 = sphi 0, %s98
      %s99 = sphi 0, %s96
      %s100 = sphi 0, %s99
      %s116 = sphi 0, %s100
      %s120 = sphi 0, %s120
      %s122 = sphi 0, %s120
      %s123 = sphi 0, %s122
      %s137 = sphi 0, %s123
      %s141 = sphi 0, %s141
      %s143 = sphi 0, %s141
      %s144 = sphi 0, %s143
      %s158 = sphi 0, %s144
      %s162 = sphi 0, %s162
      %s164 = sphi 0, %s162
      %s165 = sphi 0, %s164
      %s179 = sphi 0, %s165
      %s183 = sphi 0, %s183
      %s185 = sphi 0, %s183
      %s186 = sphi 0, %s185
      %s200 = sphi 0, %s186
      %s204 = sphi 0, %s204
      %s206 = sphi 0, %s204
      %s207 = sphi 0, %s206
      %s221 = sphi 0, %s207
      %s229 = sphi 0, %s231
      %s232 = sphi 0, %s229
      %s233 = sphi 0, %s232
      %s249 = sphi 0, %s233
    $region4: #{tpu_custom_call.1} parent=1 // loop_header_branch
      %21 = sbr.rel (%p19) target = $region8
    $region5: #{tpu_custom_call.1} parent=1 // loop_body
      %s23 = ssub.s32 %s18, 1
      %s24 = ssub.s32 %s18, 2
      %s31 = sadd.s32 1, %s26
      %p32 = scmp.ge.s32.totalorder %s31, 1
      %s33 = scalar_select %p32, 0, %s31
      %s34 = sadd.s32 1, %s25
      %s35 = scalar_select %p32, %s34, %s25
      %p36 = scmp.ge.s32.totalorder %s35, 2
      %s37 = scalar_select %p36, 0, %s35
      %s38 = ssub.s32 %s25, %s37
      %p39 = scmp.eq.s32.totalorder %s38, 0
      %s41 = sadd.s32 %s40, 1
      %s42 = scalar_select %p39, %s40, %s41
      %p45 = pneg %p39
      %p46 = scmp.eq.s32.totalorder %s18, 1
      %p47 = por %p45, %p46
      %p48 = scmp.ne.s32.totalorder %s40, %s43
      %p49 = scmp.eq.s32.totalorder %s18, 0
      %p50 = por %p48, %p49
      %p51 = scmp.ne.s32.totalorder %s40, %s43
      %p52 = scmp.eq.s32.totalorder %s23, 1
      %p53 = por %p51, %p52
      %p54 = scmp.ne.s32.totalorder %s43, %s44
      %p55 = scmp.eq.s32.totalorder %s23, 0
      %p56 = por %p54, %p55
      %p57 = scmp.ne.s32.totalorder %s43, %s44
      %p58 = scmp.eq.s32.totalorder %s24, 1
      %p59 = por %p57, %p58
      %p61 = scmp.ne.s32.totalorder %s44, %s60
      %p62 = scmp.eq.s32.totalorder %s24, 0
      %p63 = por %p61, %p62
      %s64 = ssub.s32 %s25, %s37
      %s65 = ssub.s32 %s26, %s33
      %s66 = sor.u32 %s64, %s65
      %p67 = scmp.eq.s32.totalorder %s66, 0
      %s69 = sadd.s32 %s68, 1
      %s70 = scalar_select %p67, %s68, %s69
      %p73 = pneg %p67
      %p74 = scmp.eq.s32.totalorder %s18, 1
      %p75 = por %p73, %p74
      %p76 = scmp.ne.s32.totalorder %s68, %s71
      %p77 = scmp.eq.s32.totalorder %s18, 0
      %p78 = por %p76, %p77
      %p79 = scmp.ne.s32.totalorder %s68, %s71
      %p80 = scmp.eq.s32.totalorder %s23, 1
      %p81 = por %p79, %p80
      %p82 = scmp.ne.s32.totalorder %s71, %s72
      %p83 = scmp.eq.s32.totalorder %s23, 0
      %p84 = por %p82, %p83
      %p85 = scmp.ne.s32.totalorder %s71, %s72
      %p86 = scmp.eq.s32.totalorder %s24, 1
      %p87 = por %p85, %p86
      %p89 = scmp.ne.s32.totalorder %s72, %s88
      %p90 = scmp.eq.s32.totalorder %s24, 0
      %p91 = por %p89, %p90
      %s92 = ssub.s32 %s25, %s37
      %s93 = ssub.s32 %s26, %s33
      %s94 = sor.u32 %s92, %s93
      %p95 = scmp.eq.s32.totalorder %s94, 0
      %s97 = sadd.s32 %s96, 1
      %s98 = scalar_select %p95, %s96, %s97
      %p101 = pneg %p95
      %p102 = scmp.eq.s32.totalorder %s18, 1
      %p103 = por %p101, %p102
      %p104 = scmp.ne.s32.totalorder %s96, %s99
      %p105 = scmp.eq.s32.totalorder %s18, 0
      %p106 = por %p104, %p105
      %p107 = scmp.ne.s32.totalorder %s96, %s99
      %p108 = scmp.eq.s32.totalorder %s23, 1
      %p109 = por %p107, %p108
      %p110 = scmp.ne.s32.totalorder %s99, %s100
      %p111 = scmp.eq.s32.totalorder %s23, 0
      %p112 = por %p110, %p111
      %p113 = scmp.ne.s32.totalorder %s99, %s100
      %p114 = scmp.eq.s32.totalorder %s24, 1
      %p115 = por %p113, %p114
      %p117 = scmp.ne.s32.totalorder %s100, %s116
      %p118 = scmp.eq.s32.totalorder %s24, 0
      %p119 = por %p117, %p118
      %s121 = sadd.s32 %s120, 1
      %p124 = scmp.eq.s32.totalorder %s18, 1
      %p125 = scmp.ne.s32.totalorder %s120, %s122
      %p126 = scmp.eq.s32.totalorder %s18, 0
      %p127 = por %p125, %p126
      %p128 = scmp.ne.s32.totalorder %s120, %s122
      %p129 = scmp.eq.s32.totalorder %s23, 1
      %p130 = por %p128, %p129
      %p131 = scmp.ne.s32.totalorder %s122, %s123
      %p132 = scmp.eq.s32.totalorder %s23, 0
      %p133 = por %p131, %p132
      %p134 = scmp.ne.s32.totalorder %s122, %s123
      %p135 = scmp.eq.s32.totalorder %s24, 1
      %p136 = por %p134, %p135
      %p138 = scmp.ne.s32.totalorder %s123, %s137
      %p139 = scmp.eq.s32.totalorder %s24, 0
      %p140 = por %p138, %p139
      %s142 = sadd.s32 %s141, 1
      %p145 = scmp.eq.s32.totalorder %s18, 1
      %p146 = scmp.ne.s32.totalorder %s141, %s143
      %p147 = scmp.eq.s32.totalorder %s18, 0
      %p148 = por %p146, %p147
      %p149 = scmp.ne.s32.totalorder %s141, %s143
      %p150 = scmp.eq.s32.totalorder %s23, 1
      %p151 = por %p149, %p150
      %p152 = scmp.ne.s32.totalorder %s143, %s144
      %p153 = scmp.eq.s32.totalorder %s23, 0
      %p154 = por %p152, %p153
      %p155 = scmp.ne.s32.totalorder %s143, %s144
      %p156 = scmp.eq.s32.totalorder %s24, 1
      %p157 = por %p155, %p156
      %p159 = scmp.ne.s32.totalorder %s144, %s158
      %p160 = scmp.eq.s32.totalorder %s24, 0
      %p161 = por %p159, %p160
      %s163 = sadd.s32 %s162, 1
      %p166 = scmp.eq.s32.totalorder %s18, 1
      %p167 = scmp.ne.s32.totalorder %s162, %s164
      %p168 = scmp.eq.s32.totalorder %s18, 0
      %p169 = por %p167, %p168
      %p170 = scmp.ne.s32.totalorder %s162, %s164
      %p171 = scmp.eq.s32.totalorder %s23, 1
      %p172 = por %p170, %p171
      %p173 = scmp.ne.s32.totalorder %s164, %s165
      %p174 = scmp.eq.s32.totalorder %s23, 0
      %p175 = por %p173, %p174
      %p176 = scmp.ne.s32.totalorder %s164, %s165
      %p177 = scmp.eq.s32.totalorder %s24, 1
      %p178 = por %p176, %p177
      %p180 = scmp.ne.s32.totalorder %s165, %s179
      %p181 = scmp.eq.s32.totalorder %s24, 0
      %p182 = por %p180, %p181
      %s184 = sadd.s32 %s183, 1
      %p187 = scmp.eq.s32.totalorder %s18, 1
      %p188 = scmp.ne.s32.totalorder %s183, %s185
      %p189 = scmp.eq.s32.totalorder %s18, 0
      %p190 = por %p188, %p189
      %p191 = scmp.ne.s32.totalorder %s183, %s185
      %p192 = scmp.eq.s32.totalorder %s23, 1
      %p193 = por %p191, %p192
      %p194 = scmp.ne.s32.totalorder %s185, %s186
      %p195 = scmp.eq.s32.totalorder %s23, 0
      %p196 = por %p194, %p195
      %p197 = scmp.ne.s32.totalorder %s185, %s186
      %p198 = scmp.eq.s32.totalorder %s24, 1
      %p199 = por %p197, %p198
      %p201 = scmp.ne.s32.totalorder %s186, %s200
      %p202 = scmp.eq.s32.totalorder %s24, 0
      %p203 = por %p201, %p202
      %s205 = sadd.s32 %s204, 1
      %p208 = scmp.eq.s32.totalorder %s18, 1
      %p209 = scmp.ne.s32.totalorder %s204, %s206
      %p210 = scmp.eq.s32.totalorder %s18, 0
      %p211 = por %p209, %p210
      %p212 = scmp.ne.s32.totalorder %s204, %s206
      %p213 = scmp.eq.s32.totalorder %s23, 1
      %p214 = por %p212, %p213
      %p215 = scmp.ne.s32.totalorder %s206, %s207
      %p216 = scmp.eq.s32.totalorder %s23, 0
      %p217 = por %p215, %p216
      %p218 = scmp.ne.s32.totalorder %s206, %s207
      %p219 = scmp.eq.s32.totalorder %s24, 1
      %p220 = por %p218, %p219
      %p222 = scmp.ne.s32.totalorder %s207, %s221
      %p223 = scmp.eq.s32.totalorder %s24, 0
      %p224 = por %p222, %p223
      %s225 = ssub.s32 %s25, %s37
      %s226 = ssub.s32 %s26, %s33
      %s227 = sor.u32 %s225, %s226
      %p228 = scmp.eq.s32.totalorder %s227, 0
      %s230 = sadd.s32 %s229, 1
      %s231 = scalar_select %p228, %s229, %s230
      %p234 = pneg %p228
      %p235 = scmp.eq.s32.totalorder %s18, 1
      %p236 = por %p234, %p235
      %p237 = scmp.ne.s32.totalorder %s229, %s232
      %p238 = scmp.eq.s32.totalorder %s18, 0
      %p239 = por %p237, %p238
      %p240 = scmp.ne.s32.totalorder %s229, %s232
      %p241 = scmp.eq.s32.totalorder %s23, 1
      %p242 = por %p240, %p241
      %p243 = scmp.ne.s32.totalorder %s232, %s233
      %p244 = scmp.eq.s32.totalorder %s23, 0
      %p245 = por %p243, %p244
      %p246 = scmp.ne.s32.totalorder %s232, %s233
      %p247 = scmp.eq.s32.totalorder %s24, 1
      %p248 = por %p246, %p247
      %p250 = scmp.ne.s32.totalorder %s233, %s249
      %p251 = scmp.eq.s32.totalorder %s24, 0
      %p252 = por %p250, %p251
      %p253 = scmp.le.s32.totalorder 1, %s18
      %p254 = scmp.lt.s32.totalorder %s18, 3
      %p255 = pnand %p253, %p254
      %p256 = pneg %p255
      // Predicated region
      $region9: #{tpu_custom_call.1} parent=5 // pred_check
        _
      $region10: #{tpu_custom_call.1} parent=5 // pred_check_branch
        %258 = sbr.rel (%p255) target = $region12
      $region11: #{tpu_custom_call.1} parent=5 // pred_region
        %s259 = ssub.s32 %s18, 1
        // Predicated region
        $region13: #{tpu_custom_call.1} parent=11 // pred_check
          %p260 = pneg %p133
        $region14: #{tpu_custom_call.1} parent=11 // pred_check_branch
          %262 = sbr.rel (%p260) target = $region16
        $region15: #{tpu_custom_call.1} parent=11 // pred_region
          %s264 = ssub.s32 512, 512
          %265 = vsyncadd [#allocation4], %s264
          %s266 = sshll.u32 [#allocation3], 4
          %s267 = int_to_ptr.vmem [resolvable:$true] %s266
          %272 = dma.hbm_to_vmem [thread:$0]  %s3, 512, %s267, [#allocation4], 128, 128, 8
        $region16: #{tpu_custom_call.1} parent=11 // pred_fallthru
          _
        // Predicated region
        $region17: #{tpu_custom_call.1} parent=11 // pred_check
          %p273 = pneg %p154
        $region18: #{tpu_custom_call.1} parent=11 // pred_check_branch
          %275 = sbr.rel (%p273) target = $region20
        $region19: #{tpu_custom_call.1} parent=11 // pred_region
          _
        $region20: #{tpu_custom_call.1} parent=11 // pred_fallthru
          _
        // Predicated region
        $region21: #{tpu_custom_call.1} parent=11 // pred_check
          %p276 = pneg %p175
        $region22: #{tpu_custom_call.1} parent=11 // pred_check_branch
          %278 = sbr.rel (%p276) target = $region24
        $region23: #{tpu_custom_call.1} parent=11 // pred_region
          _
        $region24: #{tpu_custom_call.1} parent=11 // pred_fallthru
          _
        // Predicated region
        $region25: #{tpu_custom_call.1} parent=11 // pred_check
          %p279 = pneg %p196
        $region26: #{tpu_custom_call.1} parent=11 // pred_check_branch
          %281 = sbr.rel (%p279) target = $region28
        $region27: #{tpu_custom_call.1} parent=11 // pred_region
          _
        $region28: #{tpu_custom_call.1} parent=11 // pred_fallthru
          _
        // Predicated region
        $region29: #{tpu_custom_call.1} parent=11 // pred_check
          %p282 = pneg %p217
        $region30: #{tpu_custom_call.1} parent=11 // pred_check_branch
          %284 = sbr.rel (%p282) target = $region32
        $region31: #{tpu_custom_call.1} parent=11 // pred_region
          _
        $region32: #{tpu_custom_call.1} parent=11 // pred_fallthru
          _
      $region12: #{tpu_custom_call.1} parent=5 // pred_fallthru
        _
      %p285 = scmp.lt.s32.totalorder %s18, 2
      // Predicated region
      $region33: #{tpu_custom_call.1} parent=5 // pred_check
        %p286 = pneg %p285
      $region34: #{tpu_custom_call.1} parent=5 // pred_check_branch
        %288 = sbr.rel (%p286) target = $region36
      $region35: #{tpu_custom_call.1} parent=5 // pred_region
        // Predicated region
        $region37: #{tpu_custom_call.1} parent=35 // pred_check
          %p289 = pneg %p50
        $region38: #{tpu_custom_call.1} parent=35 // pred_check_branch
          %291 = sbr.rel (%p289) target = $region40
        $region39: #{tpu_custom_call.1} parent=35 // pred_region
          %p292 = scmp.lt.s32.totalorder %s25, 1
          %s293 = scalar_select %p292, %s25, 1
          %s294 = smul.addr %s293, 2
          %s295 = smul.addr %s294, 8
          %s296 = scalar_lea.vmem %s0, %s295
        $region40: #{tpu_custom_call.1} parent=35 // pred_fallthru
          _
        // Predicated region
        $region41: #{tpu_custom_call.1} parent=35 // pred_check
          %p297 = pneg %p78
        $region42: #{tpu_custom_call.1} parent=35 // pred_check_branch
          %299 = sbr.rel (%p297) target = $region44
        $region43: #{tpu_custom_call.1} parent=35 // pred_region
          %p300 = scmp.lt.s32.totalorder %s25, 1
          %s301 = scalar_select %p300, %s25, 1
          %p302 = scmp.lt.s32.totalorder %s26, 0
          %s303 = scalar_select %p302, %s26, 0
          %s304 = sadd.s32 %s303, %s301
          %s305 = smul.addr %s304, 8
          %s306 = scalar_lea.vmem %s1, %s305
        $region44: #{tpu_custom_call.1} parent=35 // pred_fallthru
          _
        // Predicated region
        $region45: #{tpu_custom_call.1} parent=35 // pred_check
          %p307 = pneg %p106
        $region46: #{tpu_custom_call.1} parent=35 // pred_check_branch
          %309 = sbr.rel (%p307) target = $region48
        $region47: #{tpu_custom_call.1} parent=35 // pred_region
          %p310 = scmp.lt.s32.totalorder %s25, 1
          %s311 = scalar_select %p310, %s25, 1
          %p312 = scmp.lt.s32.totalorder %s26, 0
          %s313 = scalar_select %p312, %s26, 0
          %s314 = sadd.s32 %s313, %s311
          %s315 = smul.addr %s314, 8
          %s316 = scalar_lea.vmem %s2, %s315
        $region48: #{tpu_custom_call.1} parent=35 // pred_fallthru
          _
      $region36: #{tpu_custom_call.1} parent=5 // pred_fallthru
        _
      %p317 = scmp.le.s32.totalorder 1, %s18
      %p318 = scmp.lt.s32.totalorder %s18, 3
      %p319 = pnand %p317, %p318
      %p320 = pneg %p319
      // Predicated region
      $region49: #{tpu_custom_call.1} parent=5 // pred_check
        _
      $region50: #{tpu_custom_call.1} parent=5 // pred_check_branch
        %322 = sbr.rel (%p319) target = $region52
      $region51: #{tpu_custom_call.1} parent=5 // pred_region
        %s323 = ssub.s32 %s18, 1
        // Predicated region
        $region53: #{tpu_custom_call.1} parent=51 // pred_check
          %p324 = pneg %p133
        $region54: #{tpu_custom_call.1} parent=51 // pred_check_branch
          %326 = sbr.rel (%p324) target = $region56
        $region55: #{tpu_custom_call.1} parent=51 // pred_region
          %327 = dma.done [#allocation4], 512
        $region56: #{tpu_custom_call.1} parent=51 // pred_fallthru
          _
        %p328 = scmp.lt.s32.totalorder %s27, 1
        %s329 = scalar_select %p328, %s27, 1
        %s330 = smul.addr %s329, 2
        %s331 = smul.addr %s330, 8
        %s332 = scalar_lea.vmem %s0, %s331
        %p333 = pneg %p56
        %p334 = pneg %p53
        %p335 = scmp.lt.s32.totalorder %s27, 1
        %s336 = scalar_select %p335, %s27, 1
        %p337 = scmp.lt.s32.totalorder %s28, 0
        %s338 = scalar_select %p337, %s28, 0
        %s339 = sadd.s32 %s338, %s336
        %s340 = smul.addr %s339, 8
        %s341 = scalar_lea.vmem %s1, %s340
        %p342 = pneg %p84
        %p343 = pneg %p81
        %p344 = scmp.lt.s32.totalorder %s27, 1
        %s345 = scalar_select %p344, %s27, 1
        %p346 = scmp.lt.s32.totalorder %s28, 0
        %s347 = scalar_select %p346, %s28, 0
        %s348 = sadd.s32 %s347, %s345
        %s349 = smul.addr %s348, 8
        %s350 = scalar_lea.vmem %s2, %s349
        %p351 = pneg %p112
        %p352 = pneg %p109
        %p353 = pneg %p133
        %p354 = pneg %p130
        %p355 = pneg %p154
        %p356 = pneg %p151
        %p357 = pneg %p175
        %p358 = pneg %p172
        %p359 = pneg %p196
        %p360 = pneg %p193
        %p361 = pneg %p217
        %p362 = pneg %p214
        %p363 = pneg %p245
        %p364 = pneg %p242
        %s365 = sand.u32 %s232, 1
        %s366 = scalar_lea.sflag [#allocation5], %s365
        %s367 = sand.u32 %s232, 1
        %s368 = smul.addr %s367, 8
        %s369 = scalar_lea.vmem [#allocation6], %s368
        %p370 = scmp.lt.s32.totalorder %s27, 1
        %s371 = scalar_select %p370, %s27, 1
        %s372 = smul.addr %s371, 2
        %s373 = smul.addr %s372, 8
        %s374 = scalar_lea.vmem %s0, %s373
        %p375 = scmp.lt.s32.totalorder %s27, 1
        %s376 = scalar_select %p375, %s27, 1
        %p377 = scmp.lt.s32.totalorder %s28, 0
        %s378 = scalar_select %p377, %s28, 0
        %s379 = sadd.s32 %s378, %s376
        %s380 = smul.addr %s379, 8
        %s381 = scalar_lea.vmem %s1, %s380
        %p382 = scmp.lt.s32.totalorder %s27, 1
        %s383 = scalar_select %p382, %s27, 1
        %p384 = scmp.lt.s32.totalorder %s28, 0
        %s385 = scalar_select %p384, %s28, 0
        %s386 = sadd.s32 %s385, %s383
        %s387 = smul.addr %s386, 8
        %s388 = scalar_lea.vmem %s2, %s387
        %p389 = scmp.eq.s32.totalorder %s28, 0
        // Predicated region
        $region57: #{tpu_custom_call.1} parent=51 // pred_check
          %p390 = pneg %p389
        $region58: #{tpu_custom_call.1} parent=51 // pred_check_branch
          %392 = sbr.rel (%p390) target = $region60
        $region59: #{tpu_custom_call.1} parent=51 // pred_region
          %v393 = vld [vmem:[%s374] sm:$0xff]
          %v394 = vld [vmem:[#allocation3] sm:$0xff]
          %v395 = vld [vmem:[#allocation3 + $0x8] sm:$0xff]
          %v396 = vld [vmem:[#allocation3 + $0x10] sm:$0xff]
          %v397 = vld [vmem:[#allocation3 + $0x18] sm:$0xff]
          %v398 = vld [vmem:[%s4] sm:$0x1]
          %v400 = vlaneseq
          %v401 = vshrl.u32 %v400, 7
          %v402 = vsub.s32 0, %v401
          %v403 = vrot.slane %v398, %v402
          %vm405 = vcmask 261120
          %v407 = vsel %vm405, %v393, 0
          %409 = vmatprep.subr.mxu0 0.0
          %410 = vmatpush1.msra.mxu0 %v394
          %411 = vmatprep.subr.mxu0 0.0
          %412 = vmatpush1.msra.mxu0 %v395
          %413 = vmatprep.subr.mxu0 0.0
          %414 = vmatpush1.msra.mxu0 %v396
          %415 = vmatprep.subr.mxu0 0.0
          %416 = vmatpush1.msra.mxu0 %v397
          %417 = vmatprep.subr.mxu0 0.0
          %418 = vmatpush1.msra.mxu0 0.0
          %419 = vmatprep.subr.mxu0 0.0
          %420 = vmatpush1.msra.mxu0 0.0
          %421 = vmatprep.subr.mxu0 0.0
          %422 = vmatpush1.msra.mxu0 0.0
          %423 = vmatprep.subr.mxu0 0.0
          %424 = vmatpush1.msra.mxu0 0.0
          %425 = vmatprep.subr.mxu0 0.0
          %426 = vmatpush1.msra.mxu0 0.0
          %427 = vmatprep.subr.mxu0 0.0
          %428 = vmatpush1.msra.mxu0 0.0
          %429 = vmatprep.subr.mxu0 0.0
          %430 = vmatpush1.msra.mxu0 0.0
          %431 = vmatprep.subr.mxu0 0.0
          %432 = vmatpush1.msra.mxu0 0.0
          %433 = vmatprep.subr.mxu0 0.0
          %434 = vmatpush1.msra.mxu0 0.0
          %435 = vmatprep.subr.mxu0 0.0
          %436 = vmatpush1.msra.mxu0 0.0
          %437 = vmatprep.subr.mxu0 0.0
          %438 = vmatpush1.msra.mxu0 0.0
          %439 = vmatprep.subr.mxu0 0.0
          %440 = vmatpush1.msra.mxu0 0.0
          %441 = vmatprep.subr.mxu0 0.0
          %442 = vmatpush1.msra.mxu0 0.0
          %443 = vmatprep.subr.mxu0 0.0
          %444 = vmatpush1.msra.mxu0 0.0
          %445 = vmatprep.subr.mxu0 0.0
          %446 = vmatpush1.msra.mxu0 0.0
          %447 = vmatprep.subr.mxu0 0.0
          %448 = vmatpush1.msra.mxu0 0.0
          %449 = vmatprep.subr.mxu0 0.0
          %450 = vmatpush1.msra.mxu0 0.0
          %451 = vmatprep.subr.mxu0 0.0
          %452 = vmatpush1.msra.mxu0 0.0
          %453 = vmatprep.subr.mxu0 0.0
          %454 = vmatpush1.msra.mxu0 0.0
          %455 = vmatprep.subr.mxu0 0.0
          %456 = vmatpush1.msra.mxu0 0.0
          %457 = vmatprep.subr.mxu0 0.0
          %458 = vmatpush1.msra.mxu0 0.0
          %459 = vmatprep.subr.mxu0 0.0
          %460 = vmatpush1.msra.mxu0 0.0
          %461 = vmatprep.subr.mxu0 0.0
          %462 = vmatpush1.msra.mxu0 0.0
          %463 = vmatprep.subr.mxu0 0.0
          %464 = vmatpush1.msra.mxu0 0.0
          %465 = vmatprep.subr.mxu0 0.0
          %466 = vmatpush1.msra.mxu0 0.0
          %467 = vmatprep.subr.mxu0 0.0
          %468 = vmatpush1.msra.mxu0 0.0
          %469 = vmatprep.subr.mxu0 0.0
          %470 = vmatpush1.msra.mxu0 0.0
          %471 = vmatprep.subr.mxu0 0.0
          %472 = vmatpush1.msra.mxu0 0.0
          %473 = vmatprep.mubr.f32.mxu0 0.0
          %474 = vmatmul.mubr.f32.gmra.mrb[0].mxu0 %v407
          %v475 = vpop.f32.mrb[0].mxu0
          %v476 = vadd.f32 %v403, %v475
          %v477 = vpop.f32.mrb[0].mxu0
          %478 = vdwg.mxu0
          %479 = vst.msk [vmem:[#allocation2] sm:$0xff] %vm405, %v476
          %481 = vrot.lane.b32.xlu0 %v476, 96
          %v482 = vpop.permute.xlu0 %481
          %s484 = scalar_lea.vmem [#allocation2], 8
          %485 = vst.msk [vmem:[%s484] sm:$0xff] %vm405, %v482
        $region60: #{tpu_custom_call.1} parent=51 // pred_fallthru
          _
        %v486 = vld [vmem:[#allocation2] sm:$0xff]
        %s487 = scalar_lea.vmem [#allocation2], 8
        %v488 = vld [vmem:[%s487] sm:$0xff]
        %v489 = vld [vmem:[%s381] sm:$0xff]
        %v490 = vld [vmem:[%s388] sm:$0xff]
        %v491 = vlaneseq
        %v492 = vand.u32 %v491, 127
        %493 = vset.pattern.permute.xlu0 0
        %494 = vperm.xlu0 %493, %v489
        %v495 = vpop.permute.xlu0 %494
        %vm496 = vcmp.eq.s32.totalorder %v495, %v492
        %v497 = vsel %vm496, 1, 0
        %v498 = vcvt.s32.f32 %v497
        %499 = vset.pattern.permute.xlu0 1
        %500 = vperm.xlu0 %499, %v489
        %v501 = vpop.permute.xlu0 %500
        %vm502 = vcmp.eq.s32.totalorder %v501, %v492
        %v503 = vsel %vm502, 1, 0
        %v504 = vcvt.s32.f32 %v503
        %505 = vset.pattern.permute.xlu0 2
        %506 = vperm.xlu0 %505, %v489
        %v507 = vpop.permute.xlu0 %506
        %vm508 = vcmp.eq.s32.totalorder %v507, %v492
        %v509 = vsel %vm508, 1, 0
        %v510 = vcvt.s32.f32 %v509
        %511 = vset.pattern.permute.xlu0 3
        %512 = vperm.xlu0 %511, %v489
        %v513 = vpop.permute.xlu0 %512
        %vm514 = vcmp.eq.s32.totalorder %v513, %v492
        %v515 = vsel %vm514, 1, 0
        %v516 = vcvt.s32.f32 %v515
        %517 = vset.pattern.permute.xlu0 0
        %518 = vperm.xlu0 %517, %v490
        %v519 = vpop.permute.xlu0 %518
        %vm520 = vcmp.eq.s32.totalorder %v519, %v492
        %v521 = vsel %vm520, 1, 0
        %v522 = vcvt.s32.f32 %v521
        %523 = vset.pattern.permute.xlu0 1
        %524 = vperm.xlu0 %523, %v490
        %v525 = vpop.permute.xlu0 %524
        %vm526 = vcmp.eq.s32.totalorder %v525, %v492
        %v527 = vsel %vm526, 1, 0
        %v528 = vcvt.s32.f32 %v527
        %529 = vset.pattern.permute.xlu0 2
        %530 = vperm.xlu0 %529, %v490
        %v531 = vpop.permute.xlu0 %530
        %vm532 = vcmp.eq.s32.totalorder %v531, %v492
        %v533 = vsel %vm532, 1, 0
        %v534 = vcvt.s32.f32 %v533
        %535 = vset.pattern.permute.xlu0 3
        %536 = vperm.xlu0 %535, %v490
        %v537 = vpop.permute.xlu0 %536
        %vm538 = vcmp.eq.s32.totalorder %v537, %v492
        %v539 = vsel %vm538, 1, 0
        %v540 = vcvt.s32.f32 %v539
        %vm541 = vcmask 64512
        %v543 = vsel %vm541, %v498, 0
        %v546 = vsel %vm541, %v504, 0
        %v549 = vsel %vm541, %v510, 0
        %v552 = vsel %vm541, %v516, 0
        %554 = vmatprep.subr.mxu0 0.0
        %555 = vmatpush1.msra.mxu0 %v486
        %556 = vmatprep.subr.mxu0 0.0
        %557 = vmatpush1.msra.mxu0 0.0
        %558 = vmatprep.subr.mxu0 0.0
        %559 = vmatpush1.msra.mxu0 0.0
        %560 = vmatprep.subr.mxu0 0.0
        %561 = vmatpush1.msra.mxu0 0.0
        %562 = vmatprep.subr.mxu0 0.0
        %563 = vmatpush1.msra.mxu0 0.0
        %564 = vmatprep.subr.mxu0 0.0
        %565 = vmatpush1.msra.mxu0 0.0
        %566 = vmatprep.subr.mxu0 0.0
        %567 = vmatpush1.msra.mxu0 0.0
        %568 = vmatprep.subr.mxu0 0.0
        %569 = vmatpush1.msra.mxu0 0.0
        %570 = vmatprep.subr.mxu0 0.0
        %571 = vmatpush1.msra.mxu0 0.0
        %572 = vmatprep.subr.mxu0 0.0
        %573 = vmatpush1.msra.mxu0 0.0
        %574 = vmatprep.subr.mxu0 0.0
        %575 = vmatpush1.msra.mxu0 0.0
        %576 = vmatprep.subr.mxu0 0.0
        %577 = vmatpush1.msra.mxu0 0.0
        %578 = vmatprep.subr.mxu0 0.0
        %579 = vmatpush1.msra.mxu0 0.0
        %580 = vmatprep.subr.mxu0 0.0
        %581 = vmatpush1.msra.mxu0 0.0
        %582 = vmatprep.subr.mxu0 0.0
        %583 = vmatpush1.msra.mxu0 0.0
        %584 = vmatprep.subr.mxu0 0.0
        %585 = vmatpush1.msra.mxu0 0.0
        %586 = vmatprep.subr.mxu0 0.0
        %587 = vmatpush1.msra.mxu0 0.0
        %588 = vmatprep.subr.mxu0 0.0
        %589 = vmatpush1.msra.mxu0 0.0
        %590 = vmatprep.subr.mxu0 0.0
        %591 = vmatpush1.msra.mxu0 0.0
        %592 = vmatprep.subr.mxu0 0.0
        %593 = vmatpush1.msra.mxu0 0.0
        %594 = vmatprep.subr.mxu0 0.0
        %595 = vmatpush1.msra.mxu0 0.0
        %596 = vmatprep.subr.mxu0 0.0
        %597 = vmatpush1.msra.mxu0 0.0
        %598 = vmatprep.subr.mxu0 0.0
        %599 = vmatpush1.msra.mxu0 0.0
        %600 = vmatprep.subr.mxu0 0.0
        %601 = vmatpush1.msra.mxu0 0.0
        %602 = vmatprep.subr.mxu0 0.0
        %603 = vmatpush1.msra.mxu0 0.0
        %604 = vmatprep.subr.mxu0 0.0
        %605 = vmatpush1.msra.mxu0 0.0
        %606 = vmatprep.subr.mxu0 0.0
        %607 = vmatpush1.msra.mxu0 0.0
        %608 = vmatprep.subr.mxu0 0.0
        %609 = vmatpush1.msra.mxu0 0.0
        %610 = vmatprep.subr.mxu0 0.0
        %611 = vmatpush1.msra.mxu0 0.0
        %612 = vmatprep.subr.mxu0 0.0
        %613 = vmatpush1.msra.mxu0 0.0
        %614 = vmatprep.subr.mxu0 0.0
        %615 = vmatpush1.msra.mxu0 0.0
        %616 = vmatprep.subr.mxu0 0.0
        %617 = vmatpush1.msra.mxu0 0.0
        %618 = vmatprep.mubr.f32.mxu0 0.0
        %619 = vmatmul.mubr.f32.gmra.mrb[0].mxu0 %v543
        %v620 = vpop.f32.mrb[0].mxu0
        %v621 = vadd.f32 0.0, %v620
        %v622 = vpop.f32.mrb[0].mxu0
        %623 = vmatprep.mubr.f32.mxu0 0.0
        %624 = vmatmul.mubr.f32.gmra.mrb[0].mxu0 %v546
        %v625 = vpop.f32.mrb[0].mxu0
        %v626 = vadd.f32 0.0, %v625
        %v627 = vpop.f32.mrb[0].mxu0
        %628 = vmatprep.mubr.f32.mxu0 0.0
        %629 = vmatmul.mubr.f32.gmra.mrb[0].mxu0 %v549
        %v630 = vpop.f32.mrb[0].mxu0
        %v631 = vadd.f32 0.0, %v630
        %v632 = vpop.f32.mrb[0].mxu0
        %633 = vmatprep.mubr.f32.mxu0 0.0
        %634 = vmatmul.mubr.f32.gmra.mrb[0].mxu0 %v552
        %v635 = vpop.f32.mrb[0].mxu0
        %v636 = vadd.f32 0.0, %v635
        %v637 = vpop.f32.mrb[0].mxu0
        %638 = vdwg.mxu0
        %v640 = vsel %vm541, %v522, 0
        %v643 = vsel %vm541, %v528, 0
        %v646 = vsel %vm541, %v534, 0
        %v649 = vsel %vm541, %v540, 0
        %651 = vmatprep.subr.mxu0 0.0
        %652 = vmatpush1.msra.mxu0 %v488
        %653 = vmatprep.subr.mxu0 0.0
        %654 = vmatpush1.msra.mxu0 0.0
        %655 = vmatprep.subr.mxu0 0.0
        %656 = vmatpush1.msra.mxu0 0.0
        %657 = vmatprep.subr.mxu0 0.0
        %658 = vmatpush1.msra.mxu0 0.0
        %659 = vmatprep.subr.mxu0 0.0
        %660 = vmatpush1.msra.mxu0 0.0
        %661 = vmatprep.subr.mxu0 0.0
        %662 = vmatpush1.msra.mxu0 0.0
        %663 = vmatprep.subr.mxu0 0.0
        %664 = vmatpush1.msra.mxu0 0.0
        %665 = vmatprep.subr.mxu0 0.0
        %666 = vmatpush1.msra.mxu0 0.0
        %667 = vmatprep.subr.mxu0 0.0
        %668 = vmatpush1.msra.mxu0 0.0
        %669 = vmatprep.subr.mxu0 0.0
        %670 = vmatpush1.msra.mxu0 0.0
        %671 = vmatprep.subr.mxu0 0.0
        %672 = vmatpush1.msra.mxu0 0.0
        %673 = vmatprep.subr.mxu0 0.0
        %674 = vmatpush1.msra.mxu0 0.0
        %675 = vmatprep.subr.mxu0 0.0
        %676 = vmatpush1.msra.mxu0 0.0
        %677 = vmatprep.subr.mxu0 0.0
        %678 = vmatpush1.msra.mxu0 0.0
        %679 = vmatprep.subr.mxu0 0.0
        %680 = vmatpush1.msra.mxu0 0.0
        %681 = vmatprep.subr.mxu0 0.0
        %682 = vmatpush1.msra.mxu0 0.0
        %683 = vmatprep.subr.mxu0 0.0
        %684 = vmatpush1.msra.mxu0 0.0
        %685 = vmatprep.subr.mxu0 0.0
        %686 = vmatpush1.msra.mxu0 0.0
        %687 = vmatprep.subr.mxu0 0.0
        %688 = vmatpush1.msra.mxu0 0.0
        %689 = vmatprep.subr.mxu0 0.0
        %690 = vmatpush1.msra.mxu0 0.0
        %691 = vmatprep.subr.mxu0 0.0
        %692 = vmatpush1.msra.mxu0 0.0
        %693 = vmatprep.subr.mxu0 0.0
        %694 = vmatpush1.msra.mxu0 0.0
        %695 = vmatprep.subr.mxu0 0.0
        %696 = vmatpush1.msra.mxu0 0.0
        %697 = vmatprep.subr.mxu0 0.0
        %698 = vmatpush1.msra.mxu0 0.0
        %699 = vmatprep.subr.mxu0 0.0
        %700 = vmatpush1.msra.mxu0 0.0
        %701 = vmatprep.subr.mxu0 0.0
        %702 = vmatpush1.msra.mxu0 0.0
        %703 = vmatprep.subr.mxu0 0.0
        %704 = vmatpush1.msra.mxu0 0.0
        %705 = vmatprep.subr.mxu0 0.0
        %706 = vmatpush1.msra.mxu0 0.0
        %707 = vmatprep.subr.mxu0 0.0
        %708 = vmatpush1.msra.mxu0 0.0
        %709 = vmatprep.subr.mxu0 0.0
        %710 = vmatpush1.msra.mxu0 0.0
        %711 = vmatprep.subr.mxu0 0.0
        %712 = vmatpush1.msra.mxu0 0.0
        %713 = vmatprep.subr.mxu0 0.0
        %714 = vmatpush1.msra.mxu0 0.0
        %715 = vmatprep.mubr.f32.mxu0 0.0
        %716 = vmatmul.mubr.f32.gmra.mrb[0].mxu0 %v640
        %v717 = vpop.f32.mrb[0].mxu0
        %v718 = vadd.f32 0.0, %v717
        %v719 = vpop.f32.mrb[0].mxu0
        %720 = vmatprep.mubr.f32.mxu0 0.0
        %721 = vmatmul.mubr.f32.gmra.mrb[0].mxu0 %v643
        %v722 = vpop.f32.mrb[0].mxu0
        %v723 = vadd.f32 0.0, %v722
        %v724 = vpop.f32.mrb[0].mxu0
        %725 = vmatprep.mubr.f32.mxu0 0.0
        %726 = vmatmul.mubr.f32.gmra.mrb[0].mxu0 %v646
        %v727 = vpop.f32.mrb[0].mxu0
        %v728 = vadd.f32 0.0, %v727
        %v729 = vpop.f32.mrb[0].mxu0
        %730 = vmatprep.mubr.f32.mxu0 0.0
        %731 = vmatmul.mubr.f32.gmra.mrb[0].mxu0 %v649
        %v732 = vpop.f32.mrb[0].mxu0
        %v733 = vadd.f32 0.0, %v732
        %v734 = vpop.f32.mrb[0].mxu0
        %735 = vdwg.mxu0
        %s736 = smul.u32 %s28, 8
        %s737 = scalar_lea.vmem %s374, %s736
        %v738 = vld [vmem:[%s737] sm:$0xff]
        %v739 = vld [vmem:[%s737 + $0x8] sm:$0xff]
        %v740 = vld [vmem:[%s5] sm:$0xff]
        %v741 = vld [vmem:[%s5 + $0x8] sm:$0xff]
        %v742 = vld [vmem:[%s5 + $0x10] sm:$0xff]
        %v743 = vld [vmem:[%s5 + $0x18] sm:$0xff]
        %vm744 = vcmask 261120
        %v746 = vsel %vm744, %v738, 0
        %748 = vmatprep.subr.mxu0 0.0
        %749 = vmatpush1.msra.mxu0 %v740
        %750 = vmatprep.subr.mxu0 0.0
        %751 = vmatpush1.msra.mxu0 %v741
        %752 = vmatprep.subr.mxu0 0.0
        %753 = vmatpush1.msra.mxu0 %v742
        %754 = vmatprep.subr.mxu0 0.0
        %755 = vmatpush1.msra.mxu0 %v743
        %756 = vmatprep.subr.mxu0 0.0
        %757 = vmatpush1.msra.mxu0 0.0
        %758 = vmatprep.subr.mxu0 0.0
        %759 = vmatpush1.msra.mxu0 0.0
        %760 = vmatprep.subr.mxu0 0.0
        %761 = vmatpush1.msra.mxu0 0.0
        %762 = vmatprep.subr.mxu0 0.0
        %763 = vmatpush1.msra.mxu0 0.0
        %764 = vmatprep.subr.mxu0 0.0
        %765 = vmatpush1.msra.mxu0 0.0
        %766 = vmatprep.subr.mxu0 0.0
        %767 = vmatpush1.msra.mxu0 0.0
        %768 = vmatprep.subr.mxu0 0.0
        %769 = vmatpush1.msra.mxu0 0.0
        %770 = vmatprep.subr.mxu0 0.0
        %771 = vmatpush1.msra.mxu0 0.0
        %772 = vmatprep.subr.mxu0 0.0
        %773 = vmatpush1.msra.mxu0 0.0
        %774 = vmatprep.subr.mxu0 0.0
        %775 = vmatpush1.msra.mxu0 0.0
        %776 = vmatprep.subr.mxu0 0.0
        %777 = vmatpush1.msra.mxu0 0.0
        %778 = vmatprep.subr.mxu0 0.0
        %779 = vmatpush1.msra.mxu0 0.0
        %780 = vmatprep.subr.mxu0 0.0
        %781 = vmatpush1.msra.mxu0 0.0
        %782 = vmatprep.subr.mxu0 0.0
        %783 = vmatpush1.msra.mxu0 0.0
        %784 = vmatprep.subr.mxu0 0.0
        %785 = vmatpush1.msra.mxu0 0.0
        %786 = vmatprep.subr.mxu0 0.0
        %787 = vmatpush1.msra.mxu0 0.0
        %788 = vmatprep.subr.mxu0 0.0
        %789 = vmatpush1.msra.mxu0 0.0
        %790 = vmatprep.subr.mxu0 0.0
        %791 = vmatpush1.msra.mxu0 0.0
        %792 = vmatprep.subr.mxu0 0.0
        %793 = vmatpush1.msra.mxu0 0.0
        %794 = vmatprep.subr.mxu0 0.0
        %795 = vmatpush1.msra.mxu0 0.0
        %796 = vmatprep.subr.mxu0 0.0
        %797 = vmatpush1.msra.mxu0 0.0
        %798 = vmatprep.subr.mxu0 0.0
        %799 = vmatpush1.msra.mxu0 0.0
        %800 = vmatprep.subr.mxu0 0.0
        %801 = vmatpush1.msra.mxu0 0.0
        %802 = vmatprep.subr.mxu0 0.0
        %803 = vmatpush1.msra.mxu0 0.0
        %804 = vmatprep.subr.mxu0 0.0
        %805 = vmatpush1.msra.mxu0 0.0
        %806 = vmatprep.subr.mxu0 0.0
        %807 = vmatpush1.msra.mxu0 0.0
        %808 = vmatprep.subr.mxu0 0.0
        %809 = vmatpush1.msra.mxu0 0.0
        %810 = vmatprep.subr.mxu0 0.0
        %811 = vmatpush1.msra.mxu0 0.0
        %812 = vmatprep.mubr.f32.mxu0 0.0
        %813 = vmatmul.mubr.f32.gmra.mrb[0].mxu0 %v746
        %v814 = vpop.f32.mrb[0].mxu0
        %v815 = vadd.f32 0.0, %v814
        %v816 = vpop.f32.mrb[0].mxu0
        %817 = vdwg.mxu0
        %s818 = scalar_lea.vmem %s5, 32
        %v819 = vld [vmem:[%s818] sm:$0xff]
        %v820 = vld [vmem:[%s818 + $0x8] sm:$0xff]
        %v821 = vld [vmem:[%s818 + $0x10] sm:$0xff]
        %v822 = vld [vmem:[%s818 + $0x18] sm:$0xff]
        %vm824 = vcmask 1046528
        %v825 = vrot.slane %v738, 1
        %v826 = vrot.slane %v739, 1
        %v827 = vsel %vm824, %v825, %v826
        %v828 = vsel %vm744, %v827, 0
        %830 = vmatprep.subr.mxu0 0.0
        %831 = vmatpush1.msra.mxu0 %v819
        %832 = vmatprep.subr.mxu0 0.0
        %833 = vmatpush1.msra.mxu0 %v820
        %834 = vmatprep.subr.mxu0 0.0
        %835 = vmatpush1.msra.mxu0 %v821
        %836 = vmatprep.subr.mxu0 0.0
        %837 = vmatpush1.msra.mxu0 %v822
        %838 = vmatprep.subr.mxu0 0.0
        %839 = vmatpush1.msra.mxu0 0.0
        %840 = vmatprep.subr.mxu0 0.0
        %841 = vmatpush1.msra.mxu0 0.0
        %842 = vmatprep.subr.mxu0 0.0
        %843 = vmatpush1.msra.mxu0 0.0
        %844 = vmatprep.subr.mxu0 0.0
        %845 = vmatpush1.msra.mxu0 0.0
        %846 = vmatprep.subr.mxu0 0.0
        %847 = vmatpush1.msra.mxu0 0.0
        %848 = vmatprep.subr.mxu0 0.0
        %849 = vmatpush1.msra.mxu0 0.0
        %850 = vmatprep.subr.mxu0 0.0
        %851 = vmatpush1.msra.mxu0 0.0
        %852 = vmatprep.subr.mxu0 0.0
        %853 = vmatpush1.msra.mxu0 0.0
        %854 = vmatprep.subr.mxu0 0.0
        %855 = vmatpush1.msra.mxu0 0.0
        %856 = vmatprep.subr.mxu0 0.0
        %857 = vmatpush1.msra.mxu0 0.0
        %858 = vmatprep.subr.mxu0 0.0
        %859 = vmatpush1.msra.mxu0 0.0
        %860 = vmatprep.subr.mxu0 0.0
        %861 = vmatpush1.msra.mxu0 0.0
        %862 = vmatprep.subr.mxu0 0.0
        %863 = vmatpush1.msra.mxu0 0.0
        %864 = vmatprep.subr.mxu0 0.0
        %865 = vmatpush1.msra.mxu0 0.0
        %866 = vmatprep.subr.mxu0 0.0
        %867 = vmatpush1.msra.mxu0 0.0
        %868 = vmatprep.subr.mxu0 0.0
        %869 = vmatpush1.msra.mxu0 0.0
        %870 = vmatprep.subr.mxu0 0.0
        %871 = vmatpush1.msra.mxu0 0.0
        %872 = vmatprep.subr.mxu0 0.0
        %873 = vmatpush1.msra.mxu0 0.0
        %874 = vmatprep.subr.mxu0 0.0
        %875 = vmatpush1.msra.mxu0 0.0
        %876 = vmatprep.subr.mxu0 0.0
        %877 = vmatpush1.msra.mxu0 0.0
        %878 = vmatprep.subr.mxu0 0.0
        %879 = vmatpush1.msra.mxu0 0.0
        %880 = vmatprep.subr.mxu0 0.0
        %881 = vmatpush1.msra.mxu0 0.0
        %882 = vmatprep.subr.mxu0 0.0
        %883 = vmatpush1.msra.mxu0 0.0
        %884 = vmatprep.subr.mxu0 0.0
        %885 = vmatpush1.msra.mxu0 0.0
        %886 = vmatprep.subr.mxu0 0.0
        %887 = vmatpush1.msra.mxu0 0.0
        %888 = vmatprep.subr.mxu0 0.0
        %889 = vmatpush1.msra.mxu0 0.0
        %890 = vmatprep.subr.mxu0 0.0
        %891 = vmatpush1.msra.mxu0 0.0
        %892 = vmatprep.subr.mxu0 0.0
        %893 = vmatpush1.msra.mxu0 0.0
        %894 = vmatprep.mubr.f32.mxu0 0.0
        %895 = vmatmul.mubr.f32.gmra.mrb[0].mxu0 %v828
        %v896 = vpop.f32.mrb[0].mxu0
        %v897 = vadd.f32 0.0, %v896
        %v898 = vpop.f32.mrb[0].mxu0
        %899 = vdwg.mxu0
        %v900 = vadd.f32 %v815, %v897
        %s901 = scalar_lea.vmem %s5, 64
        %v902 = vld [vmem:[%s901] sm:$0xff]
        %v903 = vld [vmem:[%s901 + $0x8] sm:$0xff]
        %v904 = vld [vmem:[%s901 + $0x10] sm:$0xff]
        %v905 = vld [vmem:[%s901 + $0x18] sm:$0xff]
        %vm906 = vcmask 1045504
        %v907 = vrot.slane %v738, 2
        %v908 = vrot.slane %v739, 2
        %v909 = vsel %vm906, %v907, %v908
        %v910 = vsel %vm744, %v909, 0
        %912 = vmatprep.subr.mxu0 0.0
        %913 = vmatpush1.msra.mxu0 %v902
        %914 = vmatprep.subr.mxu0 0.0
        %915 = vmatpush1.msra.mxu0 %v903
        %916 = vmatprep.subr.mxu0 0.0
        %917 = vmatpush1.msra.mxu0 %v904
        %918 = vmatprep.subr.mxu0 0.0
        %919 = vmatpush1.msra.mxu0 %v905
        %920 = vmatprep.subr.mxu0 0.0
        %921 = vmatpush1.msra.mxu0 0.0
        %922 = vmatprep.subr.mxu0 0.0
        %923 = vmatpush1.msra.mxu0 0.0
        %924 = vmatprep.subr.mxu0 0.0
        %925 = vmatpush1.msra.mxu0 0.0
        %926 = vmatprep.subr.mxu0 0.0
        %927 = vmatpush1.msra.mxu0 0.0
        %928 = vmatprep.subr.mxu0 0.0
        %929 = vmatpush1.msra.mxu0 0.0
        %930 = vmatprep.subr.mxu0 0.0
        %931 = vmatpush1.msra.mxu0 0.0
        %932 = vmatprep.subr.mxu0 0.0
        %933 = vmatpush1.msra.mxu0 0.0
        %934 = vmatprep.subr.mxu0 0.0
        %935 = vmatpush1.msra.mxu0 0.0
        %936 = vmatprep.subr.mxu0 0.0
        %937 = vmatpush1.msra.mxu0 0.0
        %938 = vmatprep.subr.mxu0 0.0
        %939 = vmatpush1.msra.mxu0 0.0
        %940 = vmatprep.subr.mxu0 0.0
        %941 = vmatpush1.msra.mxu0 0.0
        %942 = vmatprep.subr.mxu0 0.0
        %943 = vmatpush1.msra.mxu0 0.0
        %944 = vmatprep.subr.mxu0 0.0
        %945 = vmatpush1.msra.mxu0 0.0
        %946 = vmatprep.subr.mxu0 0.0
        %947 = vmatpush1.msra.mxu0 0.0
        %948 = vmatprep.subr.mxu0 0.0
        %949 = vmatpush1.msra.mxu0 0.0
        %950 = vmatprep.subr.mxu0 0.0
        %951 = vmatpush1.msra.mxu0 0.0
        %952 = vmatprep.subr.mxu0 0.0
        %953 = vmatpush1.msra.mxu0 0.0
        %954 = vmatprep.subr.mxu0 0.0
        %955 = vmatpush1.msra.mxu0 0.0
        %956 = vmatprep.subr.mxu0 0.0
        %957 = vmatpush1.msra.mxu0 0.0
        %958 = vmatprep.subr.mxu0 0.0
        %959 = vmatpush1.msra.mxu0 0.0
        %960 = vmatprep.subr.mxu0 0.0
        %961 = vmatpush1.msra.mxu0 0.0
        %962 = vmatprep.subr.mxu0 0.0
        %963 = vmatpush1.msra.mxu0 0.0
        %964 = vmatprep.subr.mxu0 0.0
        %965 = vmatpush1.msra.mxu0 0.0
        %966 = vmatprep.subr.mxu0 0.0
        %967 = vmatpush1.msra.mxu0 0.0
        %968 = vmatprep.subr.mxu0 0.0
        %969 = vmatpush1.msra.mxu0 0.0
        %970 = vmatprep.subr.mxu0 0.0
        %971 = vmatpush1.msra.mxu0 0.0
        %972 = vmatprep.subr.mxu0 0.0
        %973 = vmatpush1.msra.mxu0 0.0
        %974 = vmatprep.subr.mxu0 0.0
        %975 = vmatpush1.msra.mxu0 0.0
        %976 = vmatprep.mubr.f32.mxu0 0.0
        %977 = vmatmul.mubr.f32.gmra.mrb[0].mxu0 %v910
        %v978 = vpop.f32.mrb[0].mxu0
        %v979 = vadd.f32 0.0, %v978
        %v980 = vpop.f32.mrb[0].mxu0
        %981 = vdwg.mxu0
        %v982 = vadd.f32 %v900, %v979
        %s983 = scalar_lea.vmem %s5, 96
        %v984 = vld [vmem:[%s983] sm:$0xff]
        %v985 = vld [vmem:[%s983 + $0x8] sm:$0xff]
        %v986 = vld [vmem:[%s983 + $0x10] sm:$0xff]
        %v987 = vld [vmem:[%s983 + $0x18] sm:$0xff]
        %vm988 = vcmask 1044480
        %v989 = vrot.slane %v738, 3
        %v990 = vrot.slane %v739, 3
        %v991 = vsel %vm988, %v989, %v990
        %v992 = vsel %vm744, %v991, 0
        %994 = vmatprep.subr.mxu0 0.0
        %995 = vmatpush1.msra.mxu0 %v984
        %996 = vmatprep.subr.mxu0 0.0
        %997 = vmatpush1.msra.mxu0 %v985
        %998 = vmatprep.subr.mxu0 0.0
        %999 = vmatpush1.msra.mxu0 %v986
        %1000 = vmatprep.subr.mxu0 0.0
        %1001 = vmatpush1.msra.mxu0 %v987
        %1002 = vmatprep.subr.mxu0 0.0
        %1003 = vmatpush1.msra.mxu0 0.0
        %1004 = vmatprep.subr.mxu0 0.0
        %1005 = vmatpush1.msra.mxu0 0.0
        %1006 = vmatprep.subr.mxu0 0.0
        %1007 = vmatpush1.msra.mxu0 0.0
        %1008 = vmatprep.subr.mxu0 0.0
        %1009 = vmatpush1.msra.mxu0 0.0
        %1010 = vmatprep.subr.mxu0 0.0
        %1011 = vmatpush1.msra.mxu0 0.0
        %1012 = vmatprep.subr.mxu0 0.0
        %1013 = vmatpush1.msra.mxu0 0.0
        %1014 = vmatprep.subr.mxu0 0.0
        %1015 = vmatpush1.msra.mxu0 0.0
        %1016 = vmatprep.subr.mxu0 0.0
        %1017 = vmatpush1.msra.mxu0 0.0
        %1018 = vmatprep.subr.mxu0 0.0
        %1019 = vmatpush1.msra.mxu0 0.0
        %1020 = vmatprep.subr.mxu0 0.0
        %1021 = vmatpush1.msra.mxu0 0.0
        %1022 = vmatprep.subr.mxu0 0.0
        %1023 = vmatpush1.msra.mxu0 0.0
        %1024 = vmatprep.subr.mxu0 0.0
        %1025 = vmatpush1.msra.mxu0 0.0
        %1026 = vmatprep.subr.mxu0 0.0
        %1027 = vmatpush1.msra.mxu0 0.0
        %1028 = vmatprep.subr.mxu0 0.0
        %1029 = vmatpush1.msra.mxu0 0.0
        %1030 = vmatprep.subr.mxu0 0.0
        %1031 = vmatpush1.msra.mxu0 0.0
        %1032 = vmatprep.subr.mxu0 0.0
        %1033 = vmatpush1.msra.mxu0 0.0
        %1034 = vmatprep.subr.mxu0 0.0
        %1035 = vmatpush1.msra.mxu0 0.0
        %1036 = vmatprep.subr.mxu0 0.0
        %1037 = vmatpush1.msra.mxu0 0.0
        %1038 = vmatprep.subr.mxu0 0.0
        %1039 = vmatpush1.msra.mxu0 0.0
        %1040 = vmatprep.subr.mxu0 0.0
        %1041 = vmatpush1.msra.mxu0 0.0
        %1042 = vmatprep.subr.mxu0 0.0
        %1043 = vmatpush1.msra.mxu0 0.0
        %1044 = vmatprep.subr.mxu0 0.0
        %1045 = vmatpush1.msra.mxu0 0.0
        %1046 = vmatprep.subr.mxu0 0.0
        %1047 = vmatpush1.msra.mxu0 0.0
        %1048 = vmatprep.subr.mxu0 0.0
        %1049 = vmatpush1.msra.mxu0 0.0
        %1050 = vmatprep.subr.mxu0 0.0
        %1051 = vmatpush1.msra.mxu0 0.0
        %1052 = vmatprep.subr.mxu0 0.0
        %1053 = vmatpush1.msra.mxu0 0.0
        %1054 = vmatprep.subr.mxu0 0.0
        %1055 = vmatpush1.msra.mxu0 0.0
        %1056 = vmatprep.subr.mxu0 0.0
        %1057 = vmatpush1.msra.mxu0 0.0
        %1058 = vmatprep.mubr.f32.mxu0 0.0
        %1059 = vmatmul.mubr.f32.gmra.mrb[0].mxu0 %v992
        %v1060 = vpop.f32.mrb[0].mxu0
        %v1061 = vadd.f32 0.0, %v1060
        %v1062 = vpop.f32.mrb[0].mxu0
        %1063 = vdwg.mxu0
        %v1064 = vadd.f32 %v982, %v1061
        %1069 = vrot.lane.b32.xlu0 %v718, 32
        %v1070 = vpop.permute.xlu0 %1069
        %1071 = vrot.lane.b32.xlu0 %v723, 32
        %v1072 = vpop.permute.xlu0 %1071
        %1073 = vrot.lane.b32.xlu0 %v728, 32
        %v1074 = vpop.permute.xlu0 %1073
        %1075 = vrot.lane.b32.xlu0 %v733, 32
        %v1076 = vpop.permute.xlu0 %1075
        %1085 = vrot.lane.b32.xlu0 %v815, 64
        %v1086 = vpop.permute.xlu0 %1085
        %1087 = vrot.lane.b32.xlu0 %v900, 64
        %v1088 = vpop.permute.xlu0 %1087
        %1089 = vrot.lane.b32.xlu0 %v982, 64
        %v1090 = vpop.permute.xlu0 %1089
        %1091 = vrot.lane.b32.xlu0 %v1064, 64
        %v1092 = vpop.permute.xlu0 %1091
        %v1097 = vsel %vm744, %v621, %v1070
        %v1098 = vsel %vm744, %v626, %v1072
        %v1099 = vsel %vm744, %v631, %v1074
        %v1100 = vsel %vm744, %v636, %v1076
        %vm1101 = vcmask 523264
        %v1102 = vsel %vm1101, %v1097, %v1086
        %v1103 = vsel %vm1101, %v1098, %v1088
        %v1104 = vsel %vm1101, %v1099, %v1090
        %v1105 = vsel %vm1101, %v1100, %v1092
        %v1106 = vmax.f32 %v1102, 0.0
        %v1107 = vmax.f32 %v1103, 0.0
        %v1108 = vmax.f32 %v1104, 0.0
        %v1109 = vmax.f32 %v1105, 0.0
        %v1110 = vld [vmem:[%s6] sm:$0xff]
        %v1111 = vld [vmem:[%s6 + $0x8] sm:$0xff]
        %v1112 = vld [vmem:[%s6 + $0x10] sm:$0xff]
        %v1113 = vld [vmem:[%s6 + $0x18] sm:$0xff]
        %v1114 = vld [vmem:[%s6 + $0x20] sm:$0xff]
        %v1115 = vld [vmem:[%s6 + $0x28] sm:$0xff]
        %v1116 = vld [vmem:[%s6 + $0x30] sm:$0xff]
        %v1117 = vld [vmem:[%s6 + $0x38] sm:$0xff]
        %v1118 = vld [vmem:[%s6 + $0x40] sm:$0xff]
        %v1119 = vld [vmem:[%s6 + $0x48] sm:$0xff]
        %v1120 = vld [vmem:[%s6 + $0x50] sm:$0xff]
        %v1121 = vld [vmem:[%s6 + $0x58] sm:$0xff]
        %v1122 = vld [vmem:[%s7] sm:$0x1]
        %v1124 = vlaneseq
        %v1125 = vshrl.u32 %v1124, 7
        %v1126 = vsub.s32 0, %v1125
        %v1127 = vrot.slane %v1122, %v1126
        %vm1129 = vcmask 785408
        %v1131 = vsel %vm1129, %v1106, 0
        %v1134 = vsel %vm1129, %v1107, 0
        %v1137 = vsel %vm1129, %v1108, 0
        %v1140 = vsel %vm1129, %v1109, 0
        %1142 = vmatprep.subr.mxu0 0.0
        %1143 = vmatpush1.msra.mxu0 %v1110
        %1144 = vmatprep.subr.mxu0 0.0
        %1145 = vmatpush1.msra.mxu0 %v1111
        %1146 = vmatprep.subr.mxu0 0.0
        %1147 = vmatpush1.msra.mxu0 %v1112
        %1148 = vmatprep.subr.mxu0 0.0
        %1149 = vmatpush1.msra.mxu0 %v1113
        %1150 = vmatprep.subr.mxu0 0.0
        %1151 = vmatpush1.msra.mxu0 %v1114
        %1152 = vmatprep.subr.mxu0 0.0
        %1153 = vmatpush1.msra.mxu0 %v1115
        %1154 = vmatprep.subr.mxu0 0.0
        %1155 = vmatpush1.msra.mxu0 %v1116
        %1156 = vmatprep.subr.mxu0 0.0
        %1157 = vmatpush1.msra.mxu0 %v1117
        %1158 = vmatprep.subr.mxu0 0.0
        %1159 = vmatpush1.msra.mxu0 %v1118
        %1160 = vmatprep.subr.mxu0 0.0
        %1161 = vmatpush1.msra.mxu0 %v1119
        %1162 = vmatprep.subr.mxu0 0.0
        %1163 = vmatpush1.msra.mxu0 %v1120
        %1164 = vmatprep.subr.mxu0 0.0
        %1165 = vmatpush1.msra.mxu0 %v1121
        %1166 = vmatprep.subr.mxu0 0.0
        %1167 = vmatpush1.msra.mxu0 0.0
        %1168 = vmatprep.subr.mxu0 0.0
        %1169 = vmatpush1.msra.mxu0 0.0
        %1170 = vmatprep.subr.mxu0 0.0
        %1171 = vmatpush1.msra.mxu0 0.0
        %1172 = vmatprep.subr.mxu0 0.0
        %1173 = vmatpush1.msra.mxu0 0.0
        %1174 = vmatprep.subr.mxu0 0.0
        %1175 = vmatpush1.msra.mxu0 0.0
        %1176 = vmatprep.subr.mxu0 0.0
        %1177 = vmatpush1.msra.mxu0 0.0
        %1178 = vmatprep.subr.mxu0 0.0
        %1179 = vmatpush1.msra.mxu0 0.0
        %1180 = vmatprep.subr.mxu0 0.0
        %1181 = vmatpush1.msra.mxu0 0.0
        %1182 = vmatprep.subr.mxu0 0.0
        %1183 = vmatpush1.msra.mxu0 0.0
        %1184 = vmatprep.subr.mxu0 0.0
        %1185 = vmatpush1.msra.mxu0 0.0
        %1186 = vmatprep.subr.mxu0 0.0
        %1187 = vmatpush1.msra.mxu0 0.0
        %1188 = vmatprep.subr.mxu0 0.0
        %1189 = vmatpush1.msra.mxu0 0.0
        %1190 = vmatprep.subr.mxu0 0.0
        %1191 = vmatpush1.msra.mxu0 0.0
        %1192 = vmatprep.subr.mxu0 0.0
        %1193 = vmatpush1.msra.mxu0 0.0
        %1194 = vmatprep.subr.mxu0 0.0
        %1195 = vmatpush1.msra.mxu0 0.0
        %1196 = vmatprep.subr.mxu0 0.0
        %1197 = vmatpush1.msra.mxu0 0.0
        %1198 = vmatprep.subr.mxu0 0.0
        %1199 = vmatpush1.msra.mxu0 0.0
        %1200 = vmatprep.subr.mxu0 0.0
        %1201 = vmatpush1.msra.mxu0 0.0
        %1202 = vmatprep.subr.mxu0 0.0
        %1203 = vmatpush1.msra.mxu0 0.0
        %1204 = vmatprep.subr.mxu0 0.0
        %1205 = vmatpush1.msra.mxu0 0.0
        %1206 = vmatprep.mubr.f32.mxu0 0.0
        %1207 = vmatmul.mubr.f32.gmra.mrb[0].mxu0 %v1131
        %v1208 = vpop.f32.mrb[0].mxu0
        %v1209 = vadd.f32 %v1127, %v1208
        %v1210 = vpop.f32.mrb[0].mxu0
        %1211 = vmatprep.mubr.f32.mxu0 0.0
        %1212 = vmatmul.mubr.f32.gmra.mrb[0].mxu0 %v1134
        %v1213 = vpop.f32.mrb[0].mxu0
        %v1214 = vadd.f32 %v1127, %v1213
        %v1215 = vpop.f32.mrb[0].mxu0
        %1216 = vmatprep.mubr.f32.mxu0 0.0
        %1217 = vmatmul.mubr.f32.gmra.mrb[0].mxu0 %v1137
        %v1218 = vpop.f32.mrb[0].mxu0
        %v1219 = vadd.f32 %v1127, %v1218
        %v1220 = vpop.f32.mrb[0].mxu0
        %1221 = vmatprep.mubr.f32.mxu0 0.0
        %1222 = vmatmul.mubr.f32.gmra.mrb[0].mxu0 %v1140
        %v1223 = vpop.f32.mrb[0].mxu0
        %v1224 = vadd.f32 %v1127, %v1223
        %v1225 = vpop.f32.mrb[0].mxu0
        %1226 = vdwg.mxu0
        %v1227 = vmax.f32 %v1209, 0.0
        %v1228 = vmax.f32 %v1214, 0.0
        %v1229 = vmax.f32 %v1219, 0.0
        %v1230 = vmax.f32 %v1224, 0.0
        %1232 = vrot.lane.b32.xlu0 %v1228, 32
        %v1233 = vpop.permute.xlu0 %1232
        %1236 = vrot.lane.b32.xlu0 %v1229, 64
        %v1237 = vpop.permute.xlu0 %1236
        %1240 = vrot.lane.b32.xlu0 %v1230, 96
        %v1241 = vpop.permute.xlu0 %1240
        %v1243 = vsel %vm744, %v1227, %v1233
        %v1244 = vsel %vm1101, %v1243, %v1237
        %v1245 = vsel %vm1129, %v1244, %v1241
        %1246 = vst [vmem:[%s369] sm:$0xff] %v1245
        %s1247 = sand.u32 %s232, 1
        %s1248 = scalar_lea.sflag [#allocation5], %s1247
        %s1249 = sand.u32 %s232, 1
        %s1250 = smul.addr %s1249, 8
        %s1251 = scalar_lea.vmem [#allocation6], %s1250
        // Predicated region
        $region61: #{tpu_custom_call.1} parent=51 // pred_check
          %p1252 = pneg %p242
        $region62: #{tpu_custom_call.1} parent=51 // pred_check_branch
          %1254 = sbr.rel (%p1252) target = $region64
        $region63: #{tpu_custom_call.1} parent=51 // pred_region
          %s1256 = ssub.s32 128, 128
          %1257 = vsyncadd %s1248, %s1256
          %s1258 = sadd.s32 %s28, %s27
          %s1259 = smul.addr %s1258, 128
          %s1260 = scalar_lea.hbm %s8, %s1259
          %s1262 = sshll.u32 %s1251, 4
          %s1263 = int_to_ptr.vmem [resolvable:$true] %s1262
          %1265 = dma.vmem_to_hbm [thread:$0]  %s1263, 128, %s1260, %s1248
        $region64: #{tpu_custom_call.1} parent=51 // pred_fallthru
          _
      $region52: #{tpu_custom_call.1} parent=5 // pred_fallthru
        _
      %p1266 = scmp.le.s32.totalorder 2, %s18
      // Predicated region
      $region65: #{tpu_custom_call.1} parent=5 // pred_check
        %p1267 = pneg %p1266
      $region66: #{tpu_custom_call.1} parent=5 // pred_check_branch
        %1269 = sbr.rel (%p1267) target = $region68
      $region67: #{tpu_custom_call.1} parent=5 // pred_region
        %s1270 = ssub.s32 %s18, 2
        // Predicated region
        $region69: #{tpu_custom_call.1} parent=67 // pred_check
          %p1271 = pneg %p248
        $region70: #{tpu_custom_call.1} parent=67 // pred_check_branch
          %1273 = sbr.rel (%p1271) target = $region72
        $region71: #{tpu_custom_call.1} parent=67 // pred_region
          %s1274 = sand.u32 %s233, 1
          %s1275 = scalar_lea.sflag [#allocation5], %s1274
          %s1276 = sand.u32 %s233, 1
          %s1277 = smul.addr %s1276, 8
          %s1278 = scalar_lea.vmem [#allocation6], %s1277
          %1279 = dma.done %s1275, 128
        $region72: #{tpu_custom_call.1} parent=67 // pred_fallthru
          _
      $region68: #{tpu_custom_call.1} parent=5 // pred_fallthru
        _
    $region6: #{tpu_custom_call.1} parent=1 // loop_footer
      %s22 = sadd.s32 1, %s18
    $region7: #{tpu_custom_call.1} parent=1 // loop_footer_branch
      %17 = sbr.rel target = $region3
    $region8: #{tpu_custom_call.1} parent=1 // loop_exit
      _
    %1280 = vsyncpa [#allocation4], 1
    %s1281 = scalar_lea.sflag [#allocation4], 1
    %1282 = vsyncpa %s1281, 1
    %1283 = vsyncpa [#allocation5], 1
    %s1284 = scalar_lea.sflag [#allocation5], 1
    %1285 = vsyncpa %s1284, 1

</llo_original>
